<compile_context>
chip_gen: v7x
topology: tpu7x:2x2x1
jax: 0.10.0
libtpu: 0.0.40
codegen_flags: <defaults>
</compile_context>

<pallas_src>
import jax
import jax.numpy as jnp
from jax.experimental import pallas as pl
from jax.experimental.pallas import tpu as pltpu

NEG_SLOPE = 0.01  # PyTorch nn.LeakyReLU default negative_slope


def _leaky_relu(x):
    # maximum(x, a*x) == leaky_relu(x) for 0 < a < 1 (one VALU op, no select)
    return jnp.maximum(x, NEG_SLOPE * x)


def mlp_kernel(x_ref, w1_ref, b1_ref, w2_ref, b2_ref, w3_ref, b3_ref, o_ref):
    hp = jax.lax.Precision.HIGHEST
    x = x_ref[...]                                                   # (tb, 13)

    h1 = jnp.dot(x, w1_ref[...], preferred_element_type=jnp.float32,
                 precision=hp)                                       # (tb, 50)
    h1 = _leaky_relu(h1 + b1_ref[...])

    h2 = jnp.dot(h1, w2_ref[...], preferred_element_type=jnp.float32,
                 precision=hp)                                       # (tb, 50)
    h2 = _leaky_relu(h2 + b2_ref[...])

    h3 = jnp.dot(h2, w3_ref[...], preferred_element_type=jnp.float32,
                 precision=hp)                                       # (tb, 2)
    o_ref[...] = (h3 + b3_ref[...]).astype(o_ref.dtype)


def _round_up(v, m):
    return ((v + m - 1) // m) * m


def neural_network_forward(x, params, *, tile_b=4096):
    """x: (B, 13) float32. params: PyTorch layout w:(out,in), b:(out,). Returns (B, 2)."""
    w1, b1 = params["w1"], params["b1"]
    w2, b2 = params["w2"], params["b2"]
    w3, b3 = params["w3"], params["b3"]

    B, F = x.shape
    h1_dim, h2_dim, out_dim = w1.shape[0], w2.shape[0], w3.shape[0]

    # Tiny one-off reshapes of the parameters (a few KiB total): weights to
    # (in, out) so the kernel contracts on the feature axis of the native
    # (tb, F) activation tile; biases to (1, out) for sublane broadcast.
    w1t, w2t, w3t = w1.T, w2.T, w3.T
    b1r, b2r, b3r = b1.reshape(1, -1), b2.reshape(1, -1), b3.reshape(1, -1)

    # Batch tiling: no padding / copies of x.
    #  * Small B: one full-array block (no divisibility constraint needed).
    #  * Large B: tile is a multiple of 8 sublanes, capped so there are at
    #    least 2 grid steps (lets "parallel" shard across 2 TCs on v7x).
    #    A ragged final block is handled by Pallas (OOB reads only feed rows
    #    whose OOB writes are discarded; no reduction over the batch axis).
    if B <= 2048:
        tb = B
    else:
        tb = min(_round_up(tile_b, 8), _round_up(pl.cdiv(B, 2), 8))
    grid = (pl.cdiv(B, tb),)

    flops = 2 * B * (F * h1_dim + h1_dim * h2_dim + h2_dim * out_dim)
    bytes_accessed = 4 * (B * (F + out_dim)
                          + F * h1_dim + h1_dim
                          + h1_dim * h2_dim + h2_dim
                          + h2_dim * out_dim + out_dim)
    cost = pl.CostEstimate(flops=flops, transcendentals=0,
                           bytes_accessed=bytes_accessed)

    return pl.pallas_call(
        mlp_kernel,
        out_shape=jax.ShapeDtypeStruct((B, out_dim), jnp.float32),
        grid=grid,
        in_specs=[
            pl.BlockSpec((tb, F), lambda i: (i, 0)),        # x tile (tb, 13)
            pl.BlockSpec(w1t.shape, lambda i: (0, 0)),      # (13, 50) resident
            pl.BlockSpec(b1r.shape, lambda i: (0, 0)),      # (1, 50)
            pl.BlockSpec(w2t.shape, lambda i: (0, 0)),      # (50, 50)
            pl.BlockSpec(b2r.shape, lambda i: (0, 0)),      # (1, 50)
            pl.BlockSpec(w3t.shape, lambda i: (0, 0)),      # (50, 2)
            pl.BlockSpec(b3r.shape, lambda i: (0, 0)),      # (1, 2)
        ],
        out_specs=pl.BlockSpec((tb, out_dim), lambda i: (i, 0)),
        compiler_params=pltpu.CompilerParams(
            dimension_semantics=("parallel",),
            vmem_limit_bytes=32 * 1024 * 1024,
        ),
        cost_estimate=cost,
    )(x, w1t, b1r, w2t, b2r, w3t, b3r)


def init_params(key):
    """PyTorch nn.Linear-style uniform fan-in init in PyTorch-native layout."""
    keys = jax.random.split(key, 6)

    def uniform(k, shape, fan_in):
        bound = 1.0 / jnp.sqrt(fan_in)
        return jax.random.uniform(k, shape, jnp.float32, -bound, bound)

    return {
        "w1": uniform(keys[0], (50, 13), 13.0),
        "b1": uniform(keys[1], (50,), 13.0),
        "w2": uniform(keys[2], (50, 50), 50.0),
        "b2": uniform(keys[3], (50,), 50.0),
        "w3": uniform(keys[4], (2, 50), 50.0),
        "b3": uniform(keys[5], (2,), 50.0),
    }


def reference_forward(x, p):
    hp = jax.lax.Precision.HIGHEST
    h = jnp.dot(x, p["w1"].T, precision=hp) + p["b1"]
    h = jnp.where(h > 0, h, NEG_SLOPE * h)
    h = jnp.dot(h, p["w2"].T, precision=hp) + p["b2"]
    h = jnp.where(h > 0, h, NEG_SLOPE * h)
    return jnp.dot(h, p["w3"].T, precision=hp) + p["b3"]


if __name__ == "__main__":
    key = jax.random.PRNGKey(0)
    k_params, k_x = jax.random.split(key, 2)
    params = init_params(k_params)

    # (batch, description): single tiny block, single ragged block, and a
    # >2048 batch that exercises a 2-step grid with a ragged final tile.
    for bsz in (8, 300, 2500):
        xk = jax.random.fold_in(k_x, bsz)
        x = jax.random.normal(xk, (bsz, 13), jnp.float32)
        out = jax.block_until_ready(neural_network_forward(x, params))
        ref = reference_forward(x, params)
        assert out.shape == (bsz, 2), out.shape
        assert jnp.allclose(out, ref, atol=1e-5, rtol=1e-4), \
            f"mismatch vs JAX reference at batch={bsz}"

    print("KERNEL_OK")
</pallas_src>

<mosaic_0001>
module attributes {stable_mosaic.version = 11 : i64} {
  func.func @mlp_kernel(%arg0: i32, %arg1: memref<8x13xf32, #tpu.memory_space<vmem>>, %arg2: memref<13x50xf32, #tpu.memory_space<vmem>>, %arg3: memref<1x50xf32, #tpu.memory_space<vmem>>, %arg4: memref<50x50xf32, #tpu.memory_space<vmem>>, %arg5: memref<1x50xf32, #tpu.memory_space<vmem>>, %arg6: memref<50x2xf32, #tpu.memory_space<vmem>>, %arg7: memref<1x2xf32, #tpu.memory_space<vmem>>, %arg8: memref<8x2xf32, #tpu.memory_space<vmem>>) attributes {dimension_semantics = [#tpu.dimension_semantics<parallel>], iteration_bounds = array<i64: 1>, scalar_prefetch = 0 : i64, scratch_operands = 0 : i64, tpu.core_type = #tpu.core_type<tc>, window_params = [{transform_indices = @transform_0, window_bounds = array<i64: 8, 13>}, {pipeline_mode = #tpu.pipeline_mode<synchronous>, transform_indices = @transform_1, window_bounds = array<i64: 13, 50>}, {pipeline_mode = #tpu.pipeline_mode<synchronous>, transform_indices = @transform_2, window_bounds = array<i64: 1, 50>}, {pipeline_mode = #tpu.pipeline_mode<synchronous>, transform_indices = @transform_3, window_bounds = array<i64: 50, 50>}, {pipeline_mode = #tpu.pipeline_mode<synchronous>, transform_indices = @transform_4, window_bounds = array<i64: 1, 50>}, {pipeline_mode = #tpu.pipeline_mode<synchronous>, transform_indices = @transform_5, window_bounds = array<i64: 50, 2>}, {pipeline_mode = #tpu.pipeline_mode<synchronous>, transform_indices = @transform_6, window_bounds = array<i64: 1, 2>}, {transform_indices = @transform_7, window_bounds = array<i64: 8, 2>}]} {
    %c0 = arith.constant 0 : index
    %c0_0 = arith.constant 0 : index
    %0 = vector.load %arg1[%c0, %c0_0] : memref<8x13xf32, #tpu.memory_space<vmem>>, vector<8x13xf32>
    %c0_1 = arith.constant 0 : index
    %c0_2 = arith.constant 0 : index
    %1 = vector.load %arg2[%c0_1, %c0_2] : memref<13x50xf32, #tpu.memory_space<vmem>>, vector<13x50xf32>
    %cst = arith.constant dense<0.000000e+00> : vector<8x50xf32>
    %2 = tpu.matmul %0, %1, %cst {dimension_numbers = #tpu.dot_dimension_numbers<[1], [0], [0], [1], [0, 0, 1, 1], [], []>, precision = #tpu.contract_precision<fp32>} : vector<8x13xf32>, vector<13x50xf32>, vector<8x50xf32> -> vector<8x50xf32>
    %c0_3 = arith.constant 0 : index
    %c0_4 = arith.constant 0 : index
    %3 = vector.load %arg3[%c0_3, %c0_4] : memref<1x50xf32, #tpu.memory_space<vmem>>, vector<1x50xf32>
    %4 = vector.broadcast %3 : vector<1x50xf32> to vector<8x50xf32>
    %5 = arith.addf %2, %4 : vector<8x50xf32>
    %cst_5 = arith.constant 0.00999999977 : f32
    %6 = vector.broadcast %cst_5 : f32 to vector<8x50xf32>
    %7 = arith.mulf %6, %5 : vector<8x50xf32>
    %8 = arith.maximumf %5, %7 : vector<8x50xf32>
    %c0_6 = arith.constant 0 : index
    %c0_7 = arith.constant 0 : index
    %9 = vector.load %arg4[%c0_6, %c0_7] : memref<50x50xf32, #tpu.memory_space<vmem>>, vector<50x50xf32>
    %cst_8 = arith.constant dense<0.000000e+00> : vector<8x50xf32>
    %10 = tpu.matmul %8, %9, %cst_8 {dimension_numbers = #tpu.dot_dimension_numbers<[1], [0], [0], [1], [0, 0, 1, 1], [], []>, precision = #tpu.contract_precision<fp32>} : vector<8x50xf32>, vector<50x50xf32>, vector<8x50xf32> -> vector<8x50xf32>
    %c0_9 = arith.constant 0 : index
    %c0_10 = arith.constant 0 : index
    %11 = vector.load %arg5[%c0_9, %c0_10] : memref<1x50xf32, #tpu.memory_space<vmem>>, vector<1x50xf32>
    %12 = vector.broadcast %11 : vector<1x50xf32> to vector<8x50xf32>
    %13 = arith.addf %10, %12 : vector<8x50xf32>
    %cst_11 = arith.constant 0.00999999977 : f32
    %14 = vector.broadcast %cst_11 : f32 to vector<8x50xf32>
    %15 = arith.mulf %14, %13 : vector<8x50xf32>
    %16 = arith.maximumf %13, %15 : vector<8x50xf32>
    %c0_12 = arith.constant 0 : index
    %c0_13 = arith.constant 0 : index
    %17 = vector.load %arg6[%c0_12, %c0_13] : memref<50x2xf32, #tpu.memory_space<vmem>>, vector<50x2xf32>
    %cst_14 = arith.constant dense<0.000000e+00> : vector<8x2xf32>
    %18 = tpu.matmul %16, %17, %cst_14 {dimension_numbers = #tpu.dot_dimension_numbers<[1], [0], [0], [1], [0, 0, 1, 1], [], []>, precision = #tpu.contract_precision<fp32>} : vector<8x50xf32>, vector<50x2xf32>, vector<8x2xf32> -> vector<8x2xf32>
    %c0_15 = arith.constant 0 : index
    %c0_16 = arith.constant 0 : index
    %19 = vector.load %arg7[%c0_15, %c0_16] : memref<1x2xf32, #tpu.memory_space<vmem>>, vector<1x2xf32>
    %20 = vector.broadcast %19 : vector<1x2xf32> to vector<8x2xf32>
    %21 = arith.addf %18, %20 : vector<8x2xf32>
    %c0_17 = arith.constant 0 : index
    %c0_18 = arith.constant 0 : index
    %22 = vector.load %arg8[%c0_17, %c0_18] : memref<8x2xf32, #tpu.memory_space<vmem>>, vector<8x2xf32>
    tpu.vector_store %arg8[%c0_17, %c0_18], %21 {strides = array<i32>} : memref<8x2xf32, #tpu.memory_space<vmem>>, vector<8x2xf32>,
    return
  }
  func.func @transform_0(%arg0: i32) -> (i32, i32) {
    %c0_i32 = arith.constant 0 : i32
    %c0_i32_0 = arith.constant 0 : i32
    return %arg0, %c0_i32 : i32, i32
  }
  func.func @transform_1(%arg0: i32) -> (i32, i32) {
    %c0_i32 = arith.constant 0 : i32
    %c0_i32_0 = arith.constant 0 : i32
    %c0_i32_1 = arith.constant 0 : i32
    return %c0_i32, %c0_i32_0 : i32, i32
  }
  func.func @transform_2(%arg0: i32) -> (i32, i32) {
    %c0_i32 = arith.constant 0 : i32
    %c0_i32_0 = arith.constant 0 : i32
    %c0_i32_1 = arith.constant 0 : i32
    return %c0_i32, %c0_i32_0 : i32, i32
  }
  func.func @transform_3(%arg0: i32) -> (i32, i32) {
    %c0_i32 = arith.constant 0 : i32
    %c0_i32_0 = arith.constant 0 : i32
    %c0_i32_1 = arith.constant 0 : i32
    return %c0_i32, %c0_i32_0 : i32, i32
  }
  func.func @transform_4(%arg0: i32) -> (i32, i32) {
    %c0_i32 = arith.constant 0 : i32
    %c0_i32_0 = arith.constant 0 : i32
    %c0_i32_1 = arith.constant 0 : i32
    return %c0_i32, %c0_i32_0 : i32, i32
  }
  func.func @transform_5(%arg0: i32) -> (i32, i32) {
    %c0_i32 = arith.constant 0 : i32
    %c0_i32_0 = arith.constant 0 : i32
    %c0_i32_1 = arith.constant 0 : i32
    return %c0_i32, %c0_i32_0 : i32, i32
  }
  func.func @transform_6(%arg0: i32) -> (i32, i32) {
    %c0_i32 = arith.constant 0 : i32
    %c0_i32_0 = arith.constant 0 : i32
    %c0_i32_1 = arith.constant 0 : i32
    return %c0_i32, %c0_i32_0 : i32, i32
  }
  func.func @transform_7(%arg0: i32) -> (i32, i32) {
    %c0_i32 = arith.constant 0 : i32
    %c0_i32_0 = arith.constant 0 : i32
    return %arg0, %c0_i32 : i32, i32
  }
}

</mosaic_0001>

<llo_original>
// kernel: tpu_custom_call.1
$region0: #{tpu_custom_call.1}
  #allocation0 [shape = 'u32[]', space=smem, size = 0x4, offset = 0x4, fixed_abs, tag = 'smem constant byte address 0x4 - core index']
  #allocation1 [shape = 'u32[144,128]{1,0:T(1,128)}', space=vmem, size = 0x12000, scoped, tag = 'internal scratch']
  %s0 = inlined_call_operand.vmem [shape: f32[8,13], index: 0, kind: input, shape index: {}]
  %s1 = inlined_call_operand.hbm [shape: f32[13,50], index: 1, kind: input, shape index: {}]
  %s2 = inlined_call_operand.vmem [shape: f32[1,50], index: 2, kind: input, shape index: {}]
  %s3 = inlined_call_operand.vmem [shape: f32[50,50], index: 3, kind: input, shape index: {}]
  %s4 = inlined_call_operand.vmem [shape: f32[1,50], index: 4, kind: input, shape index: {}]
  %s5 = inlined_call_operand.vmem [shape: f32[50,2], index: 5, kind: input, shape index: {}]
  %s6 = inlined_call_operand.vmem [shape: f32[1,2], index: 6, kind: input, shape index: {}]
  %s7 = inlined_call_operand.vmem [shape: f32[8,2], index: 7, kind: output, shape index: {}]
  %s8 = sld [smem:[#allocation0]]
  $region42: #{tpu_custom_call.1} parent=0
    _
  %s10 = ssub.s32 1, %s8
  %s11 = scalar_select 0, %s10, %s8
  $region1: #{tpu_custom_call.1} parent=0
    #allocation2 [shape = 'u8[8192]{0}', space=vmem, size = 0x2000, scoped, tag = 'input window, operand 1, single buffered']
    #allocation3 [shape = 's32[1]{0}', space=sflag, size = 0x4, scoped, tag = 'scoped memory for tpu_custom_call.1']
    %12 = vsyncpa [#allocation3], 0
    // Predicated region
    $region2: #{tpu_custom_call.1} parent=1 // pred_check
      _
    $region3: #{tpu_custom_call.1} parent=1 // pred_check_branch
      %14 = sbr.rel (0) target = $region5
    $region4: #{tpu_custom_call.1} parent=1 // pred_region
      _
    $region5: #{tpu_custom_call.1} parent=1 // pred_fallthru
      _
    // Predicated region
    $region6: #{tpu_custom_call.1} parent=1 // pred_check
      _
    $region7: #{tpu_custom_call.1} parent=1 // pred_check_branch
      %16 = sbr.rel (0) target = $region9
    $region8: #{tpu_custom_call.1} parent=1 // pred_region
      %s18 = ssub.s32 256, 256
      %19 = vsyncadd [#allocation3], %s18
      %s20 = sshll.u32 [#allocation2], 4
      %s21 = int_to_ptr.vmem [resolvable:$true] %s20
      %26 = dma.hbm_to_vmem [thread:$0]  %s1, 256, %s21, [#allocation3], 128, 128, 8
    $region9: #{tpu_custom_call.1} parent=1 // pred_fallthru
      _
    // Predicated region
    $region10: #{tpu_custom_call.1} parent=1 // pred_check
      _
    $region11: #{tpu_custom_call.1} parent=1 // pred_check_branch
      %28 = sbr.rel (0) target = $region13
    $region12: #{tpu_custom_call.1} parent=1 // pred_region
      _
    $region13: #{tpu_custom_call.1} parent=1 // pred_fallthru
      _
    // Predicated region
    $region14: #{tpu_custom_call.1} parent=1 // pred_check
      _
    $region15: #{tpu_custom_call.1} parent=1 // pred_check_branch
      %30 = sbr.rel (0) target = $region17
    $region16: #{tpu_custom_call.1} parent=1 // pred_region
      _
    $region17: #{tpu_custom_call.1} parent=1 // pred_fallthru
      _
    // Predicated region
    $region18: #{tpu_custom_call.1} parent=1 // pred_check
      _
    $region19: #{tpu_custom_call.1} parent=1 // pred_check_branch
      %32 = sbr.rel (0) target = $region21
    $region20: #{tpu_custom_call.1} parent=1 // pred_region
      _
    $region21: #{tpu_custom_call.1} parent=1 // pred_fallthru
      _
    // Predicated region
    $region22: #{tpu_custom_call.1} parent=1 // pred_check
      _
    $region23: #{tpu_custom_call.1} parent=1 // pred_check_branch
      %34 = sbr.rel (0) target = $region25
    $region24: #{tpu_custom_call.1} parent=1 // pred_region
      _
    $region25: #{tpu_custom_call.1} parent=1 // pred_fallthru
      _
    // Predicated region
    $region26: #{tpu_custom_call.1} parent=1 // pred_check
      _
    $region27: #{tpu_custom_call.1} parent=1 // pred_check_branch
      %36 = sbr.rel (0) target = $region29
    $region28: #{tpu_custom_call.1} parent=1 // pred_region
      _
    $region29: #{tpu_custom_call.1} parent=1 // pred_fallthru
      _
    // Predicated region
    $region30: #{tpu_custom_call.1} parent=1 // pred_check
      _
    $region31: #{tpu_custom_call.1} parent=1 // pred_check_branch
      %38 = sbr.rel (0) target = $region33
    $region32: #{tpu_custom_call.1} parent=1 // pred_region
      %39 = dma.done [#allocation3], 256
    $region33: #{tpu_custom_call.1} parent=1 // pred_fallthru
      _
    %v40 = vld [vmem:[%s0] sm:$0xff]
    %v41 = vld [vmem:[#allocation2] sm:$0xff]
    %v42 = vld [vmem:[#allocation2 + $0x8] sm:$0x1f]
    %v43 = vld [vmem:[%s2] sm:$0x1]
    %v45 = vlaneseq
    %v46 = vshrl.u32 %v45, 7
    %v47 = vsub.s32 0, %v46
    %v48 = vrot.slane %v43, %v47
    %vm50 = vcmask 105472
    %v52 = vsel %vm50, %v40, 0
    %vm54 = vcmask 1044480
    %v56 = vsel %vm54, %v42, 0
    %58 = vmatprep.subr.mxu0 0.0
    %v59 = vand.u32 %v41, 4294901760
    %60 = vmatpush1.msra.mxu0 %v59
    %61 = vmatprep.subr.mxu0 0.0
    %v62 = vand.u32 %v56, 4294901760
    %63 = vmatpush1.msra.mxu0 %v62
    %64 = vmatprep.subr.mxu0 0.0
    %65 = vmatpush1.msra.mxu0 0.0
    %66 = vmatprep.subr.mxu0 0.0
    %67 = vmatpush1.msra.mxu0 0.0
    %68 = vmatprep.subr.mxu0 0.0
    %69 = vmatpush1.msra.mxu0 0.0
    %70 = vmatprep.subr.mxu0 0.0
    %71 = vmatpush1.msra.mxu0 0.0
    %72 = vmatprep.subr.mxu0 0.0
    %73 = vmatpush1.msra.mxu0 0.0
    %74 = vmatprep.subr.mxu0 0.0
    %75 = vmatpush1.msra.mxu0 0.0
    %76 = vmatprep.subr.mxu0 0.0
    %77 = vmatpush1.msra.mxu0 0.0
    %78 = vmatprep.subr.mxu0 0.0
    %79 = vmatpush1.msra.mxu0 0.0
    %80 = vmatprep.subr.mxu0 0.0
    %81 = vmatpush1.msra.mxu0 0.0
    %82 = vmatprep.subr.mxu0 0.0
    %83 = vmatpush1.msra.mxu0 0.0
    %84 = vmatprep.subr.mxu0 0.0
    %85 = vmatpush1.msra.mxu0 0.0
    %86 = vmatprep.subr.mxu0 0.0
    %87 = vmatpush1.msra.mxu0 0.0
    %88 = vmatprep.subr.mxu0 0.0
    %89 = vmatpush1.msra.mxu0 0.0
    %90 = vmatprep.subr.mxu0 0.0
    %91 = vmatpush1.msra.mxu0 0.0
    %92 = vmatprep.subr.mxu0 0.0
    %93 = vmatpush1.msra.mxu0 0.0
    %94 = vmatprep.subr.mxu0 0.0
    %95 = vmatpush1.msra.mxu0 0.0
    %96 = vmatprep.subr.mxu0 0.0
    %97 = vmatpush1.msra.mxu0 0.0
    %98 = vmatprep.subr.mxu0 0.0
    %99 = vmatpush1.msra.mxu0 0.0
    %100 = vmatprep.subr.mxu0 0.0
    %101 = vmatpush1.msra.mxu0 0.0
    %102 = vmatprep.subr.mxu0 0.0
    %103 = vmatpush1.msra.mxu0 0.0
    %104 = vmatprep.subr.mxu0 0.0
    %105 = vmatpush1.msra.mxu0 0.0
    %106 = vmatprep.subr.mxu0 0.0
    %107 = vmatpush1.msra.mxu0 0.0
    %108 = vmatprep.subr.mxu0 0.0
    %109 = vmatpush1.msra.mxu0 0.0
    %110 = vmatprep.subr.mxu0 0.0
    %111 = vmatpush1.msra.mxu0 0.0
    %112 = vmatprep.subr.mxu0 0.0
    %113 = vmatpush1.msra.mxu0 0.0
    %114 = vmatprep.subr.mxu0 0.0
    %115 = vmatpush1.msra.mxu0 0.0
    %116 = vmatprep.subr.mxu0 0.0
    %117 = vmatpush1.msra.mxu0 0.0
    %118 = vmatprep.subr.mxu0 0.0
    %119 = vmatpush1.msra.mxu0 0.0
    %120 = vmatprep.subr.mxu0 0.0
    %121 = vmatpush1.msra.mxu0 0.0
    %122 = vmatprep.subr.mxu0 0.0
    %123 = vmatpush1.msra.mxu0 0.0
    %124 = vmatprep.mubr.f32.mxu0 0.0
    %v125 = vand.u32 %v52, 4294901760
    %v126 = vsub.f32 %v52, %v125
    %v127 = vand.u32 %v126, 4294901760
    %v128 = vsub.f32 %v126, %v127
    %v129 = vand.u32 %v128, 4294901760
    %130 = vmatmul.mubr.f32.gmra.mrb[0].mxu0 %v129
    %v131 = vpop.f32.mrb[0].mxu0
    %v132 = vadd.f32 %v48, %v131
    %v133 = vpop.f32.mrb[0].mxu0
    %134 = vdwg.mxu0
    %135 = vmatprep.subr.mxu0 0.0
    %v136 = vand.u32 %v41, 4294901760
    %v137 = vsub.f32 %v41, %v136
    %v138 = vand.u32 %v137, 4294901760
    %v139 = vsub.f32 %v137, %v138
    %v140 = vand.u32 %v139, 4294901760
    %141 = vmatpush1.msra.mxu0 %v140
    %142 = vmatprep.subr.mxu0 0.0
    %v143 = vand.u32 %v56, 4294901760
    %v144 = vsub.f32 %v56, %v143
    %v145 = vand.u32 %v144, 4294901760
    %v146 = vsub.f32 %v144, %v145
    %v147 = vand.u32 %v146, 4294901760
    %148 = vmatpush1.msra.mxu0 %v147
    %149 = vmatprep.subr.mxu0 0.0
    %150 = vmatpush1.msra.mxu0 0.0
    %151 = vmatprep.subr.mxu0 0.0
    %152 = vmatpush1.msra.mxu0 0.0
    %153 = vmatprep.subr.mxu0 0.0
    %154 = vmatpush1.msra.mxu0 0.0
    %155 = vmatprep.subr.mxu0 0.0
    %156 = vmatpush1.msra.mxu0 0.0
    %157 = vmatprep.subr.mxu0 0.0
    %158 = vmatpush1.msra.mxu0 0.0
    %159 = vmatprep.subr.mxu0 0.0
    %160 = vmatpush1.msra.mxu0 0.0
    %161 = vmatprep.subr.mxu0 0.0
    %162 = vmatpush1.msra.mxu0 0.0
    %163 = vmatprep.subr.mxu0 0.0
    %164 = vmatpush1.msra.mxu0 0.0
    %165 = vmatprep.subr.mxu0 0.0
    %166 = vmatpush1.msra.mxu0 0.0
    %167 = vmatprep.subr.mxu0 0.0
    %168 = vmatpush1.msra.mxu0 0.0
    %169 = vmatprep.subr.mxu0 0.0
    %170 = vmatpush1.msra.mxu0 0.0
    %171 = vmatprep.subr.mxu0 0.0
    %172 = vmatpush1.msra.mxu0 0.0
    %173 = vmatprep.subr.mxu0 0.0
    %174 = vmatpush1.msra.mxu0 0.0
    %175 = vmatprep.subr.mxu0 0.0
    %176 = vmatpush1.msra.mxu0 0.0
    %177 = vmatprep.subr.mxu0 0.0
    %178 = vmatpush1.msra.mxu0 0.0
    %179 = vmatprep.subr.mxu0 0.0
    %180 = vmatpush1.msra.mxu0 0.0
    %181 = vmatprep.subr.mxu0 0.0
    %182 = vmatpush1.msra.mxu0 0.0
    %183 = vmatprep.subr.mxu0 0.0
    %184 = vmatpush1.msra.mxu0 0.0
    %185 = vmatprep.subr.mxu0 0.0
    %186 = vmatpush1.msra.mxu0 0.0
    %187 = vmatprep.subr.mxu0 0.0
    %188 = vmatpush1.msra.mxu0 0.0
    %189 = vmatprep.subr.mxu0 0.0
    %190 = vmatpush1.msra.mxu0 0.0
    %191 = vmatprep.subr.mxu0 0.0
    %192 = vmatpush1.msra.mxu0 0.0
    %193 = vmatprep.subr.mxu0 0.0
    %194 = vmatpush1.msra.mxu0 0.0
    %195 = vmatprep.subr.mxu0 0.0
    %196 = vmatpush1.msra.mxu0 0.0
    %197 = vmatprep.subr.mxu0 0.0
    %198 = vmatpush1.msra.mxu0 0.0
    %199 = vmatprep.subr.mxu0 0.0
    %200 = vmatpush1.msra.mxu0 0.0
    %201 = vmatprep.subr.mxu0 0.0
    %202 = vmatpush1.msra.mxu0 0.0
    %203 = vmatprep.subr.mxu0 0.0
    %204 = vmatpush1.msra.mxu0 0.0
    %205 = vmatprep.subr.mxu0 0.0
    %206 = vmatpush1.msra.mxu0 0.0
    %207 = vmatprep.subr.mxu0 0.0
    %208 = vmatpush1.msra.mxu0 0.0
    %209 = vmatprep.mubr.f32.mxu0 0.0
    %v210 = vand.u32 %v52, 4294901760
    %211 = vmatmul.mubr.f32.gmra.mrb[0].mxu0 %v210
    %v212 = vpop.f32.mrb[0].mxu0
    %v213 = vadd.f32 %v132, %v212
    %v214 = vpop.f32.mrb[0].mxu0
    %215 = vdwg.mxu0
    %216 = vmatprep.subr.mxu0 0.0
    %v217 = vand.u32 %v41, 4294901760
    %v218 = vsub.f32 %v41, %v217
    %219 = vmatpush1.msra.mxu0 %v218
    %220 = vmatprep.subr.mxu0 0.0
    %v221 = vand.u32 %v56, 4294901760
    %v222 = vsub.f32 %v56, %v221
    %223 = vmatpush1.msra.mxu0 %v222
    %224 = vmatprep.subr.mxu0 0.0
    %225 = vmatpush1.msra.mxu0 0.0
    %226 = vmatprep.subr.mxu0 0.0
    %227 = vmatpush1.msra.mxu0 0.0
    %228 = vmatprep.subr.mxu0 0.0
    %229 = vmatpush1.msra.mxu0 0.0
    %230 = vmatprep.subr.mxu0 0.0
    %231 = vmatpush1.msra.mxu0 0.0
    %232 = vmatprep.subr.mxu0 0.0
    %233 = vmatpush1.msra.mxu0 0.0
    %234 = vmatprep.subr.mxu0 0.0
    %235 = vmatpush1.msra.mxu0 0.0
    %236 = vmatprep.subr.mxu0 0.0
    %237 = vmatpush1.msra.mxu0 0.0
    %238 = vmatprep.subr.mxu0 0.0
    %239 = vmatpush1.msra.mxu0 0.0
    %240 = vmatprep.subr.mxu0 0.0
    %241 = vmatpush1.msra.mxu0 0.0
    %242 = vmatprep.subr.mxu0 0.0
    %243 = vmatpush1.msra.mxu0 0.0
    %244 = vmatprep.subr.mxu0 0.0
    %245 = vmatpush1.msra.mxu0 0.0
    %246 = vmatprep.subr.mxu0 0.0
    %247 = vmatpush1.msra.mxu0 0.0
    %248 = vmatprep.subr.mxu0 0.0
    %249 = vmatpush1.msra.mxu0 0.0
    %250 = vmatprep.subr.mxu0 0.0
    %251 = vmatpush1.msra.mxu0 0.0
    %252 = vmatprep.subr.mxu0 0.0
    %253 = vmatpush1.msra.mxu0 0.0
    %254 = vmatprep.subr.mxu0 0.0
    %255 = vmatpush1.msra.mxu0 0.0
    %256 = vmatprep.subr.mxu0 0.0
    %257 = vmatpush1.msra.mxu0 0.0
    %258 = vmatprep.subr.mxu0 0.0
    %259 = vmatpush1.msra.mxu0 0.0
    %260 = vmatprep.subr.mxu0 0.0
    %261 = vmatpush1.msra.mxu0 0.0
    %262 = vmatprep.subr.mxu0 0.0
    %263 = vmatpush1.msra.mxu0 0.0
    %264 = vmatprep.subr.mxu0 0.0
    %265 = vmatpush1.msra.mxu0 0.0
    %266 = vmatprep.subr.mxu0 0.0
    %267 = vmatpush1.msra.mxu0 0.0
    %268 = vmatprep.subr.mxu0 0.0
    %269 = vmatpush1.msra.mxu0 0.0
    %270 = vmatprep.subr.mxu0 0.0
    %271 = vmatpush1.msra.mxu0 0.0
    %272 = vmatprep.subr.mxu0 0.0
    %273 = vmatpush1.msra.mxu0 0.0
    %274 = vmatprep.subr.mxu0 0.0
    %275 = vmatpush1.msra.mxu0 0.0
    %276 = vmatprep.subr.mxu0 0.0
    %277 = vmatpush1.msra.mxu0 0.0
    %278 = vmatprep.subr.mxu0 0.0
    %279 = vmatpush1.msra.mxu0 0.0
    %280 = vmatprep.subr.mxu0 0.0
    %281 = vmatpush1.msra.mxu0 0.0
    %282 = vmatprep.subr.mxu0 0.0
    %283 = vmatpush1.msra.mxu0 0.0
    %284 = vmatprep.mubr.f32.mxu0 0.0
    %v285 = vand.u32 %v52, 4294901760
    %v286 = vsub.f32 %v52, %v285
    %287 = vmatmul.mubr.f32.gmra.mrb[0].mxu0 %v286
    %v288 = vpop.f32.mrb[0].mxu0
    %v289 = vadd.f32 %v213, %v288
    %v290 = vpop.f32.mrb[0].mxu0
    %291 = vdwg.mxu0
    %292 = vmatprep.subr.mxu0 0.0
    %v293 = vand.u32 %v41, 4294901760
    %294 = vmatpush1.msra.mxu0 %v293
    %295 = vmatprep.subr.mxu0 0.0
    %v296 = vand.u32 %v56, 4294901760
    %297 = vmatpush1.msra.mxu0 %v296
    %298 = vmatprep.subr.mxu0 0.0
    %299 = vmatpush1.msra.mxu0 0.0
    %300 = vmatprep.subr.mxu0 0.0
    %301 = vmatpush1.msra.mxu0 0.0
    %302 = vmatprep.subr.mxu0 0.0
    %303 = vmatpush1.msra.mxu0 0.0
    %304 = vmatprep.subr.mxu0 0.0
    %305 = vmatpush1.msra.mxu0 0.0
    %306 = vmatprep.subr.mxu0 0.0
    %307 = vmatpush1.msra.mxu0 0.0
    %308 = vmatprep.subr.mxu0 0.0
    %309 = vmatpush1.msra.mxu0 0.0
    %310 = vmatprep.subr.mxu0 0.0
    %311 = vmatpush1.msra.mxu0 0.0
    %312 = vmatprep.subr.mxu0 0.0
    %313 = vmatpush1.msra.mxu0 0.0
    %314 = vmatprep.subr.mxu0 0.0
    %315 = vmatpush1.msra.mxu0 0.0
    %316 = vmatprep.subr.mxu0 0.0
    %317 = vmatpush1.msra.mxu0 0.0
    %318 = vmatprep.subr.mxu0 0.0
    %319 = vmatpush1.msra.mxu0 0.0
    %320 = vmatprep.subr.mxu0 0.0
    %321 = vmatpush1.msra.mxu0 0.0
    %322 = vmatprep.subr.mxu0 0.0
    %323 = vmatpush1.msra.mxu0 0.0
    %324 = vmatprep.subr.mxu0 0.0
    %325 = vmatpush1.msra.mxu0 0.0
    %326 = vmatprep.subr.mxu0 0.0
    %327 = vmatpush1.msra.mxu0 0.0
    %328 = vmatprep.subr.mxu0 0.0
    %329 = vmatpush1.msra.mxu0 0.0
    %330 = vmatprep.subr.mxu0 0.0
    %331 = vmatpush1.msra.mxu0 0.0
    %332 = vmatprep.subr.mxu0 0.0
    %333 = vmatpush1.msra.mxu0 0.0
    %334 = vmatprep.subr.mxu0 0.0
    %335 = vmatpush1.msra.mxu0 0.0
    %336 = vmatprep.subr.mxu0 0.0
    %337 = vmatpush1.msra.mxu0 0.0
    %338 = vmatprep.subr.mxu0 0.0
    %339 = vmatpush1.msra.mxu0 0.0
    %340 = vmatprep.subr.mxu0 0.0
    %341 = vmatpush1.msra.mxu0 0.0
    %342 = vmatprep.subr.mxu0 0.0
    %343 = vmatpush1.msra.mxu0 0.0
    %344 = vmatprep.subr.mxu0 0.0
    %345 = vmatpush1.msra.mxu0 0.0
    %346 = vmatprep.subr.mxu0 0.0
    %347 = vmatpush1.msra.mxu0 0.0
    %348 = vmatprep.subr.mxu0 0.0
    %349 = vmatpush1.msra.mxu0 0.0
    %350 = vmatprep.subr.mxu0 0.0
    %351 = vmatpush1.msra.mxu0 0.0
    %352 = vmatprep.subr.mxu0 0.0
    %353 = vmatpush1.msra.mxu0 0.0
    %354 = vmatprep.subr.mxu0 0.0
    %355 = vmatpush1.msra.mxu0 0.0
    %356 = vmatprep.subr.mxu0 0.0
    %357 = vmatpush1.msra.mxu0 0.0
    %358 = vmatprep.mubr.f32.mxu0 0.0
    %v359 = vand.u32 %v52, 4294901760
    %v360 = vsub.f32 %v52, %v359
    %v361 = vand.u32 %v360, 4294901760
    %362 = vmatmul.mubr.f32.gmra.mrb[0].mxu0 %v361
    %v363 = vpop.f32.mrb[0].mxu0
    %v364 = vadd.f32 %v289, %v363
    %v365 = vpop.f32.mrb[0].mxu0
    %366 = vdwg.mxu0
    %367 = vmatprep.subr.mxu0 0.0
    %v368 = vand.u32 %v41, 4294901760
    %v369 = vsub.f32 %v41, %v368
    %v370 = vand.u32 %v369, 4294901760
    %371 = vmatpush1.msra.mxu0 %v370
    %372 = vmatprep.subr.mxu0 0.0
    %v373 = vand.u32 %v56, 4294901760
    %v374 = vsub.f32 %v56, %v373
    %v375 = vand.u32 %v374, 4294901760
    %376 = vmatpush1.msra.mxu0 %v375
    %377 = vmatprep.subr.mxu0 0.0
    %378 = vmatpush1.msra.mxu0 0.0
    %379 = vmatprep.subr.mxu0 0.0
    %380 = vmatpush1.msra.mxu0 0.0
    %381 = vmatprep.subr.mxu0 0.0
    %382 = vmatpush1.msra.mxu0 0.0
    %383 = vmatprep.subr.mxu0 0.0
    %384 = vmatpush1.msra.mxu0 0.0
    %385 = vmatprep.subr.mxu0 0.0
    %386 = vmatpush1.msra.mxu0 0.0
    %387 = vmatprep.subr.mxu0 0.0
    %388 = vmatpush1.msra.mxu0 0.0
    %389 = vmatprep.subr.mxu0 0.0
    %390 = vmatpush1.msra.mxu0 0.0
    %391 = vmatprep.subr.mxu0 0.0
    %392 = vmatpush1.msra.mxu0 0.0
    %393 = vmatprep.subr.mxu0 0.0
    %394 = vmatpush1.msra.mxu0 0.0
    %395 = vmatprep.subr.mxu0 0.0
    %396 = vmatpush1.msra.mxu0 0.0
    %397 = vmatprep.subr.mxu0 0.0
    %398 = vmatpush1.msra.mxu0 0.0
    %399 = vmatprep.subr.mxu0 0.0
    %400 = vmatpush1.msra.mxu0 0.0
    %401 = vmatprep.subr.mxu0 0.0
    %402 = vmatpush1.msra.mxu0 0.0
    %403 = vmatprep.subr.mxu0 0.0
    %404 = vmatpush1.msra.mxu0 0.0
    %405 = vmatprep.subr.mxu0 0.0
    %406 = vmatpush1.msra.mxu0 0.0
    %407 = vmatprep.subr.mxu0 0.0
    %408 = vmatpush1.msra.mxu0 0.0
    %409 = vmatprep.subr.mxu0 0.0
    %410 = vmatpush1.msra.mxu0 0.0
    %411 = vmatprep.subr.mxu0 0.0
    %412 = vmatpush1.msra.mxu0 0.0
    %413 = vmatprep.subr.mxu0 0.0
    %414 = vmatpush1.msra.mxu0 0.0
    %415 = vmatprep.subr.mxu0 0.0
    %416 = vmatpush1.msra.mxu0 0.0
    %417 = vmatprep.subr.mxu0 0.0
    %418 = vmatpush1.msra.mxu0 0.0
    %419 = vmatprep.subr.mxu0 0.0
    %420 = vmatpush1.msra.mxu0 0.0
    %421 = vmatprep.subr.mxu0 0.0
    %422 = vmatpush1.msra.mxu0 0.0
    %423 = vmatprep.subr.mxu0 0.0
    %424 = vmatpush1.msra.mxu0 0.0
    %425 = vmatprep.subr.mxu0 0.0
    %426 = vmatpush1.msra.mxu0 0.0
    %427 = vmatprep.subr.mxu0 0.0
    %428 = vmatpush1.msra.mxu0 0.0
    %429 = vmatprep.subr.mxu0 0.0
    %430 = vmatpush1.msra.mxu0 0.0
    %431 = vmatprep.subr.mxu0 0.0
    %432 = vmatpush1.msra.mxu0 0.0
    %433 = vmatprep.subr.mxu0 0.0
    %434 = vmatpush1.msra.mxu0 0.0
    %435 = vmatprep.subr.mxu0 0.0
    %436 = vmatpush1.msra.mxu0 0.0
    %437 = vmatprep.mubr.f32.mxu0 0.0
    %v438 = vand.u32 %v52, 4294901760
    %439 = vmatmul.mubr.f32.gmra.mrb[0].mxu0 %v438
    %v440 = vpop.f32.mrb[0].mxu0
    %v441 = vadd.f32 %v364, %v440
    %v442 = vpop.f32.mrb[0].mxu0
    %443 = vdwg.mxu0
    %444 = vmatprep.subr.mxu0 0.0
    %v445 = vand.u32 %v41, 4294901760
    %446 = vmatpush1.msra.mxu0 %v445
    %447 = vmatprep.subr.mxu0 0.0
    %v448 = vand.u32 %v56, 4294901760
    %449 = vmatpush1.msra.mxu0 %v448
    %450 = vmatprep.subr.mxu0 0.0
    %451 = vmatpush1.msra.mxu0 0.0
    %452 = vmatprep.subr.mxu0 0.0
    %453 = vmatpush1.msra.mxu0 0.0
    %454 = vmatprep.subr.mxu0 0.0
    %455 = vmatpush1.msra.mxu0 0.0
    %456 = vmatprep.subr.mxu0 0.0
    %457 = vmatpush1.msra.mxu0 0.0
    %458 = vmatprep.subr.mxu0 0.0
    %459 = vmatpush1.msra.mxu0 0.0
    %460 = vmatprep.subr.mxu0 0.0
    %461 = vmatpush1.msra.mxu0 0.0
    %462 = vmatprep.subr.mxu0 0.0
    %463 = vmatpush1.msra.mxu0 0.0
    %464 = vmatprep.subr.mxu0 0.0
    %465 = vmatpush1.msra.mxu0 0.0
    %466 = vmatprep.subr.mxu0 0.0
    %467 = vmatpush1.msra.mxu0 0.0
    %468 = vmatprep.subr.mxu0 0.0
    %469 = vmatpush1.msra.mxu0 0.0
    %470 = vmatprep.subr.mxu0 0.0
    %471 = vmatpush1.msra.mxu0 0.0
    %472 = vmatprep.subr.mxu0 0.0
    %473 = vmatpush1.msra.mxu0 0.0
    %474 = vmatprep.subr.mxu0 0.0
    %475 = vmatpush1.msra.mxu0 0.0
    %476 = vmatprep.subr.mxu0 0.0
    %477 = vmatpush1.msra.mxu0 0.0
    %478 = vmatprep.subr.mxu0 0.0
    %479 = vmatpush1.msra.mxu0 0.0
    %480 = vmatprep.subr.mxu0 0.0
    %481 = vmatpush1.msra.mxu0 0.0
    %482 = vmatprep.subr.mxu0 0.0
    %483 = vmatpush1.msra.mxu0 0.0
    %484 = vmatprep.subr.mxu0 0.0
    %485 = vmatpush1.msra.mxu0 0.0
    %486 = vmatprep.subr.mxu0 0.0
    %487 = vmatpush1.msra.mxu0 0.0
    %488 = vmatprep.subr.mxu0 0.0
    %489 = vmatpush1.msra.mxu0 0.0
    %490 = vmatprep.subr.mxu0 0.0
    %491 = vmatpush1.msra.mxu0 0.0
    %492 = vmatprep.subr.mxu0 0.0
    %493 = vmatpush1.msra.mxu0 0.0
    %494 = vmatprep.subr.mxu0 0.0
    %495 = vmatpush1.msra.mxu0 0.0
    %496 = vmatprep.subr.mxu0 0.0
    %497 = vmatpush1.msra.mxu0 0.0
    %498 = vmatprep.subr.mxu0 0.0
    %499 = vmatpush1.msra.mxu0 0.0
    %500 = vmatprep.subr.mxu0 0.0
    %501 = vmatpush1.msra.mxu0 0.0
    %502 = vmatprep.subr.mxu0 0.0
    %503 = vmatpush1.msra.mxu0 0.0
    %504 = vmatprep.subr.mxu0 0.0
    %505 = vmatpush1.msra.mxu0 0.0
    %506 = vmatprep.subr.mxu0 0.0
    %507 = vmatpush1.msra.mxu0 0.0
    %508 = vmatprep.subr.mxu0 0.0
    %509 = vmatpush1.msra.mxu0 0.0
    %510 = vmatprep.mubr.f32.mxu0 0.0
    %v511 = vand.u32 %v52, 4294901760
    %512 = vmatmul.mubr.f32.gmra.mrb[0].mxu0 %v511
    %v513 = vpop.f32.mrb[0].mxu0
    %v514 = vadd.f32 %v441, %v513
    %v515 = vpop.f32.mrb[0].mxu0
    %516 = vdwg.mxu0
    %v517 = vmul.f32 %v514, 0.01
    %v518 = vmax.f32 %v514, %v517
    %v519 = vld [vmem:[%s3] sm:$0xff]
    %v520 = vld [vmem:[%s3 + $0x8] sm:$0xff]
    %v521 = vld [vmem:[%s3 + $0x10] sm:$0xff]
    %v522 = vld [vmem:[%s3 + $0x18] sm:$0xff]
    %v523 = vld [vmem:[%s3 + $0x20] sm:$0xff]
    %v524 = vld [vmem:[%s3 + $0x28] sm:$0xff]
    %v525 = vld [vmem:[%s3 + $0x30] sm:$0x3]
    %v526 = vld [vmem:[%s4] sm:$0x1]
    %v528 = vlaneseq
    %v529 = vshrl.u32 %v528, 7
    %v530 = vsub.s32 0, %v529
    %v531 = vrot.slane %v526, %v530
    %vm533 = vcmask 408576
    %v535 = vsel %vm533, %v518, 0
    %vm537 = vcmask 1041408
    %v539 = vsel %vm537, %v525, 0
    %541 = vmatprep.subr.mxu0 0.0
    %v542 = vand.u32 %v519, 4294901760
    %543 = vmatpush1.msra.mxu0 %v542
    %544 = vmatprep.subr.mxu0 0.0
    %v545 = vand.u32 %v520, 4294901760
    %546 = vmatpush1.msra.mxu0 %v545
    %547 = vmatprep.subr.mxu0 0.0
    %v548 = vand.u32 %v521, 4294901760
    %549 = vmatpush1.msra.mxu0 %v548
    %550 = vmatprep.subr.mxu0 0.0
    %v551 = vand.u32 %v522, 4294901760
    %552 = vmatpush1.msra.mxu0 %v551
    %553 = vmatprep.subr.mxu0 0.0
    %v554 = vand.u32 %v523, 4294901760
    %555 = vmatpush1.msra.mxu0 %v554
    %556 = vmatprep.subr.mxu0 0.0
    %v557 = vand.u32 %v524, 4294901760
    %558 = vmatpush1.msra.mxu0 %v557
    %559 = vmatprep.subr.mxu0 0.0
    %v560 = vand.u32 %v539, 4294901760
    %561 = vmatpush1.msra.mxu0 %v560
    %562 = vmatprep.subr.mxu0 0.0
    %563 = vmatpush1.msra.mxu0 0.0
    %564 = vmatprep.subr.mxu0 0.0
    %565 = vmatpush1.msra.mxu0 0.0
    %566 = vmatprep.subr.mxu0 0.0
    %567 = vmatpush1.msra.mxu0 0.0
    %568 = vmatprep.subr.mxu0 0.0
    %569 = vmatpush1.msra.mxu0 0.0
    %570 = vmatprep.subr.mxu0 0.0
    %571 = vmatpush1.msra.mxu0 0.0
    %572 = vmatprep.subr.mxu0 0.0
    %573 = vmatpush1.msra.mxu0 0.0
    %574 = vmatprep.subr.mxu0 0.0
    %575 = vmatpush1.msra.mxu0 0.0
    %576 = vmatprep.subr.mxu0 0.0
    %577 = vmatpush1.msra.mxu0 0.0
    %578 = vmatprep.subr.mxu0 0.0
    %579 = vmatpush1.msra.mxu0 0.0
    %580 = vmatprep.subr.mxu0 0.0
    %581 = vmatpush1.msra.mxu0 0.0
    %582 = vmatprep.subr.mxu0 0.0
    %583 = vmatpush1.msra.mxu0 0.0
    %584 = vmatprep.subr.mxu0 0.0
    %585 = vmatpush1.msra.mxu0 0.0
    %586 = vmatprep.subr.mxu0 0.0
    %587 = vmatpush1.msra.mxu0 0.0
    %588 = vmatprep.subr.mxu0 0.0
    %589 = vmatpush1.msra.mxu0 0.0
    %590 = vmatprep.subr.mxu0 0.0
    %591 = vmatpush1.msra.mxu0 0.0
    %592 = vmatprep.subr.mxu0 0.0
    %593 = vmatpush1.msra.mxu0 0.0
    %594 = vmatprep.subr.mxu0 0.0
    %595 = vmatpush1.msra.mxu0 0.0
    %596 = vmatprep.subr.mxu0 0.0
    %597 = vmatpush1.msra.mxu0 0.0
    %598 = vmatprep.subr.mxu0 0.0
    %599 = vmatpush1.msra.mxu0 0.0
    %600 = vmatprep.subr.mxu0 0.0
    %601 = vmatpush1.msra.mxu0 0.0
    %602 = vmatprep.subr.mxu0 0.0
    %603 = vmatpush1.msra.mxu0 0.0
    %604 = vmatprep.subr.mxu0 0.0
    %605 = vmatpush1.msra.mxu0 0.0
    %606 = vmatprep.subr.mxu0 0.0
    %607 = vmatpush1.msra.mxu0 0.0
    %608 = vmatprep.subr.mxu0 0.0
    %609 = vmatpush1.msra.mxu0 0.0
    %610 = vmatprep.subr.mxu0 0.0
    %611 = vmatpush1.msra.mxu0 0.0
    %612 = vmatprep.mubr.f32.mxu0 0.0
    %v613 = vand.u32 %v535, 4294901760
    %v614 = vsub.f32 %v535, %v613
    %v615 = vand.u32 %v614, 4294901760
    %v616 = vsub.f32 %v614, %v615
    %v617 = vand.u32 %v616, 4294901760
    %618 = vmatmul.mubr.f32.gmra.mrb[0].mxu0 %v617
    %v619 = vpop.f32.mrb[0].mxu0
    %v620 = vadd.f32 %v531, %v619
    %v621 = vpop.f32.mrb[0].mxu0
    %622 = vdwg.mxu0
    %623 = vmatprep.subr.mxu0 0.0
    %v624 = vand.u32 %v519, 4294901760
    %v625 = vsub.f32 %v519, %v624
    %v626 = vand.u32 %v625, 4294901760
    %v627 = vsub.f32 %v625, %v626
    %v628 = vand.u32 %v627, 4294901760
    %629 = vmatpush1.msra.mxu0 %v628
    %630 = vmatprep.subr.mxu0 0.0
    %v631 = vand.u32 %v520, 4294901760
    %v632 = vsub.f32 %v520, %v631
    %v633 = vand.u32 %v632, 4294901760
    %v634 = vsub.f32 %v632, %v633
    %v635 = vand.u32 %v634, 4294901760
    %636 = vmatpush1.msra.mxu0 %v635
    %637 = vmatprep.subr.mxu0 0.0
    %v638 = vand.u32 %v521, 4294901760
    %v639 = vsub.f32 %v521, %v638
    %v640 = vand.u32 %v639, 4294901760
    %v641 = vsub.f32 %v639, %v640
    %v642 = vand.u32 %v641, 4294901760
    %643 = vmatpush1.msra.mxu0 %v642
    %644 = vmatprep.subr.mxu0 0.0
    %v645 = vand.u32 %v522, 4294901760
    %v646 = vsub.f32 %v522, %v645
    %v647 = vand.u32 %v646, 4294901760
    %v648 = vsub.f32 %v646, %v647
    %v649 = vand.u32 %v648, 4294901760
    %650 = vmatpush1.msra.mxu0 %v649
    %651 = vmatprep.subr.mxu0 0.0
    %v652 = vand.u32 %v523, 4294901760
    %v653 = vsub.f32 %v523, %v652
    %v654 = vand.u32 %v653, 4294901760
    %v655 = vsub.f32 %v653, %v654
    %v656 = vand.u32 %v655, 4294901760
    %657 = vmatpush1.msra.mxu0 %v656
    %658 = vmatprep.subr.mxu0 0.0
    %v659 = vand.u32 %v524, 4294901760
    %v660 = vsub.f32 %v524, %v659
    %v661 = vand.u32 %v660, 4294901760
    %v662 = vsub.f32 %v660, %v661
    %v663 = vand.u32 %v662, 4294901760
    %664 = vmatpush1.msra.mxu0 %v663
    %665 = vmatprep.subr.mxu0 0.0
    %v666 = vand.u32 %v539, 4294901760
    %v667 = vsub.f32 %v539, %v666
    %v668 = vand.u32 %v667, 4294901760
    %v669 = vsub.f32 %v667, %v668
    %v670 = vand.u32 %v669, 4294901760
    %671 = vmatpush1.msra.mxu0 %v670
    %672 = vmatprep.subr.mxu0 0.0
    %673 = vmatpush1.msra.mxu0 0.0
    %674 = vmatprep.subr.mxu0 0.0
    %675 = vmatpush1.msra.mxu0 0.0
    %676 = vmatprep.subr.mxu0 0.0
    %677 = vmatpush1.msra.mxu0 0.0
    %678 = vmatprep.subr.mxu0 0.0
    %679 = vmatpush1.msra.mxu0 0.0
    %680 = vmatprep.subr.mxu0 0.0
    %681 = vmatpush1.msra.mxu0 0.0
    %682 = vmatprep.subr.mxu0 0.0
    %683 = vmatpush1.msra.mxu0 0.0
    %684 = vmatprep.subr.mxu0 0.0
    %685 = vmatpush1.msra.mxu0 0.0
    %686 = vmatprep.subr.mxu0 0.0
    %687 = vmatpush1.msra.mxu0 0.0
    %688 = vmatprep.subr.mxu0 0.0
    %689 = vmatpush1.msra.mxu0 0.0
    %690 = vmatprep.subr.mxu0 0.0
    %691 = vmatpush1.msra.mxu0 0.0
    %692 = vmatprep.subr.mxu0 0.0
    %693 = vmatpush1.msra.mxu0 0.0
    %694 = vmatprep.subr.mxu0 0.0
    %695 = vmatpush1.msra.mxu0 0.0
    %696 = vmatprep.subr.mxu0 0.0
    %697 = vmatpush1.msra.mxu0 0.0
    %698 = vmatprep.subr.mxu0 0.0
    %699 = vmatpush1.msra.mxu0 0.0
    %700 = vmatprep.subr.mxu0 0.0
    %701 = vmatpush1.msra.mxu0 0.0
    %702 = vmatprep.subr.mxu0 0.0
    %703 = vmatpush1.msra.mxu0 0.0
    %704 = vmatprep.subr.mxu0 0.0
    %705 = vmatpush1.msra.mxu0 0.0
    %706 = vmatprep.subr.mxu0 0.0
    %707 = vmatpush1.msra.mxu0 0.0
    %708 = vmatprep.subr.mxu0 0.0
    %709 = vmatpush1.msra.mxu0 0.0
    %710 = vmatprep.subr.mxu0 0.0
    %711 = vmatpush1.msra.mxu0 0.0
    %712 = vmatprep.subr.mxu0 0.0
    %713 = vmatpush1.msra.mxu0 0.0
    %714 = vmatprep.subr.mxu0 0.0
    %715 = vmatpush1.msra.mxu0 0.0
    %716 = vmatprep.subr.mxu0 0.0
    %717 = vmatpush1.msra.mxu0 0.0
    %718 = vmatprep.subr.mxu0 0.0
    %719 = vmatpush1.msra.mxu0 0.0
    %720 = vmatprep.subr.mxu0 0.0
    %721 = vmatpush1.msra.mxu0 0.0
    %722 = vmatprep.mubr.f32.mxu0 0.0
    %v723 = vand.u32 %v535, 4294901760
    %724 = vmatmul.mubr.f32.gmra.mrb[0].mxu0 %v723
    %v725 = vpop.f32.mrb[0].mxu0
    %v726 = vadd.f32 %v620, %v725
    %v727 = vpop.f32.mrb[0].mxu0
    %728 = vdwg.mxu0
    %729 = vmatprep.subr.mxu0 0.0
    %v730 = vand.u32 %v519, 4294901760
    %v731 = vsub.f32 %v519, %v730
    %732 = vmatpush1.msra.mxu0 %v731
    %733 = vmatprep.subr.mxu0 0.0
    %v734 = vand.u32 %v520, 4294901760
    %v735 = vsub.f32 %v520, %v734
    %736 = vmatpush1.msra.mxu0 %v735
    %737 = vmatprep.subr.mxu0 0.0
    %v738 = vand.u32 %v521, 4294901760
    %v739 = vsub.f32 %v521, %v738
    %740 = vmatpush1.msra.mxu0 %v739
    %741 = vmatprep.subr.mxu0 0.0
    %v742 = vand.u32 %v522, 4294901760
    %v743 = vsub.f32 %v522, %v742
    %744 = vmatpush1.msra.mxu0 %v743
    %745 = vmatprep.subr.mxu0 0.0
    %v746 = vand.u32 %v523, 4294901760
    %v747 = vsub.f32 %v523, %v746
    %748 = vmatpush1.msra.mxu0 %v747
    %749 = vmatprep.subr.mxu0 0.0
    %v750 = vand.u32 %v524, 4294901760
    %v751 = vsub.f32 %v524, %v750
    %752 = vmatpush1.msra.mxu0 %v751
    %753 = vmatprep.subr.mxu0 0.0
    %v754 = vand.u32 %v539, 4294901760
    %v755 = vsub.f32 %v539, %v754
    %756 = vmatpush1.msra.mxu0 %v755
    %757 = vmatprep.subr.mxu0 0.0
    %758 = vmatpush1.msra.mxu0 0.0
    %759 = vmatprep.subr.mxu0 0.0
    %760 = vmatpush1.msra.mxu0 0.0
    %761 = vmatprep.subr.mxu0 0.0
    %762 = vmatpush1.msra.mxu0 0.0
    %763 = vmatprep.subr.mxu0 0.0
    %764 = vmatpush1.msra.mxu0 0.0
    %765 = vmatprep.subr.mxu0 0.0
    %766 = vmatpush1.msra.mxu0 0.0
    %767 = vmatprep.subr.mxu0 0.0
    %768 = vmatpush1.msra.mxu0 0.0
    %769 = vmatprep.subr.mxu0 0.0
    %770 = vmatpush1.msra.mxu0 0.0
    %771 = vmatprep.subr.mxu0 0.0
    %772 = vmatpush1.msra.mxu0 0.0
    %773 = vmatprep.subr.mxu0 0.0
    %774 = vmatpush1.msra.mxu0 0.0
    %775 = vmatprep.subr.mxu0 0.0
    %776 = vmatpush1.msra.mxu0 0.0
    %777 = vmatprep.subr.mxu0 0.0
    %778 = vmatpush1.msra.mxu0 0.0
    %779 = vmatprep.subr.mxu0 0.0
    %780 = vmatpush1.msra.mxu0 0.0
    %781 = vmatprep.subr.mxu0 0.0
    %782 = vmatpush1.msra.mxu0 0.0
    %783 = vmatprep.subr.mxu0 0.0
    %784 = vmatpush1.msra.mxu0 0.0
    %785 = vmatprep.subr.mxu0 0.0
    %786 = vmatpush1.msra.mxu0 0.0
    %787 = vmatprep.subr.mxu0 0.0
    %788 = vmatpush1.msra.mxu0 0.0
    %789 = vmatprep.subr.mxu0 0.0
    %790 = vmatpush1.msra.mxu0 0.0
    %791 = vmatprep.subr.mxu0 0.0
    %792 = vmatpush1.msra.mxu0 0.0
    %793 = vmatprep.subr.mxu0 0.0
    %794 = vmatpush1.msra.mxu0 0.0
    %795 = vmatprep.subr.mxu0 0.0
    %796 = vmatpush1.msra.mxu0 0.0
    %797 = vmatprep.subr.mxu0 0.0
    %798 = vmatpush1.msra.mxu0 0.0
    %799 = vmatprep.subr.mxu0 0.0
    %800 = vmatpush1.msra.mxu0 0.0
    %801 = vmatprep.subr.mxu0 0.0
    %802 = vmatpush1.msra.mxu0 0.0
    %803 = vmatprep.subr.mxu0 0.0
    %804 = vmatpush1.msra.mxu0 0.0
    %805 = vmatprep.subr.mxu0 0.0
    %806 = vmatpush1.msra.mxu0 0.0
    %807 = vmatprep.mubr.f32.mxu0 0.0
    %v808 = vand.u32 %v535, 4294901760
    %v809 = vsub.f32 %v535, %v808
    %810 = vmatmul.mubr.f32.gmra.mrb[0].mxu0 %v809
    %v811 = vpop.f32.mrb[0].mxu0
    %v812 = vadd.f32 %v726, %v811
    %v813 = vpop.f32.mrb[0].mxu0
    %814 = vdwg.mxu0
    %815 = vmatprep.subr.mxu0 0.0
    %v816 = vand.u32 %v519, 4294901760
    %817 = vmatpush1.msra.mxu0 %v816
    %818 = vmatprep.subr.mxu0 0.0
    %v819 = vand.u32 %v520, 4294901760
    %820 = vmatpush1.msra.mxu0 %v819
    %821 = vmatprep.subr.mxu0 0.0
    %v822 = vand.u32 %v521, 4294901760
    %823 = vmatpush1.msra.mxu0 %v822
    %824 = vmatprep.subr.mxu0 0.0
    %v825 = vand.u32 %v522, 4294901760
    %826 = vmatpush1.msra.mxu0 %v825
    %827 = vmatprep.subr.mxu0 0.0
    %v828 = vand.u32 %v523, 4294901760
    %829 = vmatpush1.msra.mxu0 %v828
    %830 = vmatprep.subr.mxu0 0.0
    %v831 = vand.u32 %v524, 4294901760
    %832 = vmatpush1.msra.mxu0 %v831
    %833 = vmatprep.subr.mxu0 0.0
    %v834 = vand.u32 %v539, 4294901760
    %835 = vmatpush1.msra.mxu0 %v834
    %836 = vmatprep.subr.mxu0 0.0
    %837 = vmatpush1.msra.mxu0 0.0
    %838 = vmatprep.subr.mxu0 0.0
    %839 = vmatpush1.msra.mxu0 0.0
    %840 = vmatprep.subr.mxu0 0.0
    %841 = vmatpush1.msra.mxu0 0.0
    %842 = vmatprep.subr.mxu0 0.0
    %843 = vmatpush1.msra.mxu0 0.0
    %844 = vmatprep.subr.mxu0 0.0
    %845 = vmatpush1.msra.mxu0 0.0
    %846 = vmatprep.subr.mxu0 0.0
    %847 = vmatpush1.msra.mxu0 0.0
    %848 = vmatprep.subr.mxu0 0.0
    %849 = vmatpush1.msra.mxu0 0.0
    %850 = vmatprep.subr.mxu0 0.0
    %851 = vmatpush1.msra.mxu0 0.0
    %852 = vmatprep.subr.mxu0 0.0
    %853 = vmatpush1.msra.mxu0 0.0
    %854 = vmatprep.subr.mxu0 0.0
    %855 = vmatpush1.msra.mxu0 0.0
    %856 = vmatprep.subr.mxu0 0.0
    %857 = vmatpush1.msra.mxu0 0.0
    %858 = vmatprep.subr.mxu0 0.0
    %859 = vmatpush1.msra.mxu0 0.0
    %860 = vmatprep.subr.mxu0 0.0
    %861 = vmatpush1.msra.mxu0 0.0
    %862 = vmatprep.subr.mxu0 0.0
    %863 = vmatpush1.msra.mxu0 0.0
    %864 = vmatprep.subr.mxu0 0.0
    %865 = vmatpush1.msra.mxu0 0.0
    %866 = vmatprep.subr.mxu0 0.0
    %867 = vmatpush1.msra.mxu0 0.0
    %868 = vmatprep.subr.mxu0 0.0
    %869 = vmatpush1.msra.mxu0 0.0
    %870 = vmatprep.subr.mxu0 0.0
    %871 = vmatpush1.msra.mxu0 0.0
    %872 = vmatprep.subr.mxu0 0.0
    %873 = vmatpush1.msra.mxu0 0.0
    %874 = vmatprep.subr.mxu0 0.0
    %875 = vmatpush1.msra.mxu0 0.0
    %876 = vmatprep.subr.mxu0 0.0
    %877 = vmatpush1.msra.mxu0 0.0
    %878 = vmatprep.subr.mxu0 0.0
    %879 = vmatpush1.msra.mxu0 0.0
    %880 = vmatprep.subr.mxu0 0.0
    %881 = vmatpush1.msra.mxu0 0.0
    %882 = vmatprep.subr.mxu0 0.0
    %883 = vmatpush1.msra.mxu0 0.0
    %884 = vmatprep.subr.mxu0 0.0
    %885 = vmatpush1.msra.mxu0 0.0
    %886 = vmatprep.mubr.f32.mxu0 0.0
    %v887 = vand.u32 %v535, 4294901760
    %v888 = vsub.f32 %v535, %v887
    %v889 = vand.u32 %v888, 4294901760
    %890 = vmatmul.mubr.f32.gmra.mrb[0].mxu0 %v889
    %v891 = vpop.f32.mrb[0].mxu0
    %v892 = vadd.f32 %v812, %v891
    %v893 = vpop.f32.mrb[0].mxu0
    %894 = vdwg.mxu0
    %895 = vmatprep.subr.mxu0 0.0
    %v896 = vand.u32 %v519, 4294901760
    %v897 = vsub.f32 %v519, %v896
    %v898 = vand.u32 %v897, 4294901760
    %899 = vmatpush1.msra.mxu0 %v898
    %900 = vmatprep.subr.mxu0 0.0
    %v901 = vand.u32 %v520, 4294901760
    %v902 = vsub.f32 %v520, %v901
    %v903 = vand.u32 %v902, 4294901760
    %904 = vmatpush1.msra.mxu0 %v903
    %905 = vmatprep.subr.mxu0 0.0
    %v906 = vand.u32 %v521, 4294901760
    %v907 = vsub.f32 %v521, %v906
    %v908 = vand.u32 %v907, 4294901760
    %909 = vmatpush1.msra.mxu0 %v908
    %910 = vmatprep.subr.mxu0 0.0
    %v911 = vand.u32 %v522, 4294901760
    %v912 = vsub.f32 %v522, %v911
    %v913 = vand.u32 %v912, 4294901760
    %914 = vmatpush1.msra.mxu0 %v913
    %915 = vmatprep.subr.mxu0 0.0
    %v916 = vand.u32 %v523, 4294901760
    %v917 = vsub.f32 %v523, %v916
    %v918 = vand.u32 %v917, 4294901760
    %919 = vmatpush1.msra.mxu0 %v918
    %920 = vmatprep.subr.mxu0 0.0
    %v921 = vand.u32 %v524, 4294901760
    %v922 = vsub.f32 %v524, %v921
    %v923 = vand.u32 %v922, 4294901760
    %924 = vmatpush1.msra.mxu0 %v923
    %925 = vmatprep.subr.mxu0 0.0
    %v926 = vand.u32 %v539, 4294901760
    %v927 = vsub.f32 %v539, %v926
    %v928 = vand.u32 %v927, 4294901760
    %929 = vmatpush1.msra.mxu0 %v928
    %930 = vmatprep.subr.mxu0 0.0
    %931 = vmatpush1.msra.mxu0 0.0
    %932 = vmatprep.subr.mxu0 0.0
    %933 = vmatpush1.msra.mxu0 0.0
    %934 = vmatprep.subr.mxu0 0.0
    %935 = vmatpush1.msra.mxu0 0.0
    %936 = vmatprep.subr.mxu0 0.0
    %937 = vmatpush1.msra.mxu0 0.0
    %938 = vmatprep.subr.mxu0 0.0
    %939 = vmatpush1.msra.mxu0 0.0
    %940 = vmatprep.subr.mxu0 0.0
    %941 = vmatpush1.msra.mxu0 0.0
    %942 = vmatprep.subr.mxu0 0.0
    %943 = vmatpush1.msra.mxu0 0.0
    %944 = vmatprep.subr.mxu0 0.0
    %945 = vmatpush1.msra.mxu0 0.0
    %946 = vmatprep.subr.mxu0 0.0
    %947 = vmatpush1.msra.mxu0 0.0
    %948 = vmatprep.subr.mxu0 0.0
    %949 = vmatpush1.msra.mxu0 0.0
    %950 = vmatprep.subr.mxu0 0.0
    %951 = vmatpush1.msra.mxu0 0.0
    %952 = vmatprep.subr.mxu0 0.0
    %953 = vmatpush1.msra.mxu0 0.0
    %954 = vmatprep.subr.mxu0 0.0
    %955 = vmatpush1.msra.mxu0 0.0
    %956 = vmatprep.subr.mxu0 0.0
    %957 = vmatpush1.msra.mxu0 0.0
    %958 = vmatprep.subr.mxu0 0.0
    %959 = vmatpush1.msra.mxu0 0.0
    %960 = vmatprep.subr.mxu0 0.0
    %961 = vmatpush1.msra.mxu0 0.0
    %962 = vmatprep.subr.mxu0 0.0
    %963 = vmatpush1.msra.mxu0 0.0
    %964 = vmatprep.subr.mxu0 0.0
    %965 = vmatpush1.msra.mxu0 0.0
    %966 = vmatprep.subr.mxu0 0.0
    %967 = vmatpush1.msra.mxu0 0.0
    %968 = vmatprep.subr.mxu0 0.0
    %969 = vmatpush1.msra.mxu0 0.0
    %970 = vmatprep.subr.mxu0 0.0
    %971 = vmatpush1.msra.mxu0 0.0
    %972 = vmatprep.subr.mxu0 0.0
    %973 = vmatpush1.msra.mxu0 0.0
    %974 = vmatprep.subr.mxu0 0.0
    %975 = vmatpush1.msra.mxu0 0.0
    %976 = vmatprep.subr.mxu0 0.0
    %977 = vmatpush1.msra.mxu0 0.0
    %978 = vmatprep.subr.mxu0 0.0
    %979 = vmatpush1.msra.mxu0 0.0
    %980 = vmatprep.mubr.f32.mxu0 0.0
    %v981 = vand.u32 %v535, 4294901760
    %982 = vmatmul.mubr.f32.gmra.mrb[0].mxu0 %v981
    %v983 = vpop.f32.mrb[0].mxu0
    %v984 = vadd.f32 %v892, %v983
    %v985 = vpop.f32.mrb[0].mxu0
    %986 = vdwg.mxu0
    %987 = vmatprep.subr.mxu0 0.0
    %v988 = vand.u32 %v519, 4294901760
    %989 = vmatpush1.msra.mxu0 %v988
    %990 = vmatprep.subr.mxu0 0.0
    %v991 = vand.u32 %v520, 4294901760
    %992 = vmatpush1.msra.mxu0 %v991
    %993 = vmatprep.subr.mxu0 0.0
    %v994 = vand.u32 %v521, 4294901760
    %995 = vmatpush1.msra.mxu0 %v994
    %996 = vmatprep.subr.mxu0 0.0
    %v997 = vand.u32 %v522, 4294901760
    %998 = vmatpush1.msra.mxu0 %v997
    %999 = vmatprep.subr.mxu0 0.0
    %v1000 = vand.u32 %v523, 4294901760
    %1001 = vmatpush1.msra.mxu0 %v1000
    %1002 = vmatprep.subr.mxu0 0.0
    %v1003 = vand.u32 %v524, 4294901760
    %1004 = vmatpush1.msra.mxu0 %v1003
    %1005 = vmatprep.subr.mxu0 0.0
    %v1006 = vand.u32 %v539, 4294901760
    %1007 = vmatpush1.msra.mxu0 %v1006
    %1008 = vmatprep.subr.mxu0 0.0
    %1009 = vmatpush1.msra.mxu0 0.0
    %1010 = vmatprep.subr.mxu0 0.0
    %1011 = vmatpush1.msra.mxu0 0.0
    %1012 = vmatprep.subr.mxu0 0.0
    %1013 = vmatpush1.msra.mxu0 0.0
    %1014 = vmatprep.subr.mxu0 0.0
    %1015 = vmatpush1.msra.mxu0 0.0
    %1016 = vmatprep.subr.mxu0 0.0
    %1017 = vmatpush1.msra.mxu0 0.0
    %1018 = vmatprep.subr.mxu0 0.0
    %1019 = vmatpush1.msra.mxu0 0.0
    %1020 = vmatprep.subr.mxu0 0.0
    %1021 = vmatpush1.msra.mxu0 0.0
    %1022 = vmatprep.subr.mxu0 0.0
    %1023 = vmatpush1.msra.mxu0 0.0
    %1024 = vmatprep.subr.mxu0 0.0
    %1025 = vmatpush1.msra.mxu0 0.0
    %1026 = vmatprep.subr.mxu0 0.0
    %1027 = vmatpush1.msra.mxu0 0.0
    %1028 = vmatprep.subr.mxu0 0.0
    %1029 = vmatpush1.msra.mxu0 0.0
    %1030 = vmatprep.subr.mxu0 0.0
    %1031 = vmatpush1.msra.mxu0 0.0
    %1032 = vmatprep.subr.mxu0 0.0
    %1033 = vmatpush1.msra.mxu0 0.0
    %1034 = vmatprep.subr.mxu0 0.0
    %1035 = vmatpush1.msra.mxu0 0.0
    %1036 = vmatprep.subr.mxu0 0.0
    %1037 = vmatpush1.msra.mxu0 0.0
    %1038 = vmatprep.subr.mxu0 0.0
    %1039 = vmatpush1.msra.mxu0 0.0
    %1040 = vmatprep.subr.mxu0 0.0
    %1041 = vmatpush1.msra.mxu0 0.0
    %1042 = vmatprep.subr.mxu0 0.0
    %1043 = vmatpush1.msra.mxu0 0.0
    %1044 = vmatprep.subr.mxu0 0.0
    %1045 = vmatpush1.msra.mxu0 0.0
    %1046 = vmatprep.subr.mxu0 0.0
    %1047 = vmatpush1.msra.mxu0 0.0
    %1048 = vmatprep.subr.mxu0 0.0
    %1049 = vmatpush1.msra.mxu0 0.0
    %1050 = vmatprep.subr.mxu0 0.0
    %1051 = vmatpush1.msra.mxu0 0.0
    %1052 = vmatprep.subr.mxu0 0.0
    %1053 = vmatpush1.msra.mxu0 0.0
    %1054 = vmatprep.subr.mxu0 0.0
    %1055 = vmatpush1.msra.mxu0 0.0
    %1056 = vmatprep.subr.mxu0 0.0
    %1057 = vmatpush1.msra.mxu0 0.0
    %1058 = vmatprep.mubr.f32.mxu0 0.0
    %v1059 = vand.u32 %v535, 4294901760
    %1060 = vmatmul.mubr.f32.gmra.mrb[0].mxu0 %v1059
    %v1061 = vpop.f32.mrb[0].mxu0
    %v1062 = vadd.f32 %v984, %v1061
    %v1063 = vpop.f32.mrb[0].mxu0
    %1064 = vdwg.mxu0
    %v1065 = vmul.f32 %v1062, 0.01
    %v1066 = vmax.f32 %v1062, %v1065
    %v1067 = vld [vmem:[%s5] sm:$0xff]
    %v1068 = vld [vmem:[%s5 + $0x8] sm:$0xff]
    %v1069 = vld [vmem:[%s5 + $0x10] sm:$0xff]
    %v1070 = vld [vmem:[%s5 + $0x18] sm:$0xff]
    %v1071 = vld [vmem:[%s5 + $0x20] sm:$0xff]
    %v1072 = vld [vmem:[%s5 + $0x28] sm:$0xff]
    %v1073 = vld [vmem:[%s5 + $0x30] sm:$0x3]
    %v1074 = vld [vmem:[%s6] sm:$0x1]
    %v1076 = vlaneseq
    %v1077 = vshrl.u32 %v1076, 7
    %v1078 = vsub.s32 0, %v1077
    %v1079 = vrot.slane %v1074, %v1078
    %v1082 = vsel %vm533, %v1066, 0
    %v1085 = vsel %vm537, %v1073, 0
    %1087 = vmatprep.subr.mxu0 0.0
    %v1088 = vand.u32 %v1067, 4294901760
    %1089 = vmatpush1.msra.mxu0 %v1088
    %1090 = vmatprep.subr.mxu0 0.0
    %v1091 = vand.u32 %v1068, 4294901760
    %1092 = vmatpush1.msra.mxu0 %v1091
    %1093 = vmatprep.subr.mxu0 0.0
    %v1094 = vand.u32 %v1069, 4294901760
    %1095 = vmatpush1.msra.mxu0 %v1094
    %1096 = vmatprep.subr.mxu0 0.0
    %v1097 = vand.u32 %v1070, 4294901760
    %1098 = vmatpush1.msra.mxu0 %v1097
    %1099 = vmatprep.subr.mxu0 0.0
    %v1100 = vand.u32 %v1071, 4294901760
    %1101 = vmatpush1.msra.mxu0 %v1100
    %1102 = vmatprep.subr.mxu0 0.0
    %v1103 = vand.u32 %v1072, 4294901760
    %1104 = vmatpush1.msra.mxu0 %v1103
    %1105 = vmatprep.subr.mxu0 0.0
    %v1106 = vand.u32 %v1085, 4294901760
    %1107 = vmatpush1.msra.mxu0 %v1106
    %1108 = vmatprep.subr.mxu0 0.0
    %1109 = vmatpush1.msra.mxu0 0.0
    %1110 = vmatprep.subr.mxu0 0.0
    %1111 = vmatpush1.msra.mxu0 0.0
    %1112 = vmatprep.subr.mxu0 0.0
    %1113 = vmatpush1.msra.mxu0 0.0
    %1114 = vmatprep.subr.mxu0 0.0
    %1115 = vmatpush1.msra.mxu0 0.0
    %1116 = vmatprep.subr.mxu0 0.0
    %1117 = vmatpush1.msra.mxu0 0.0
    %1118 = vmatprep.subr.mxu0 0.0
    %1119 = vmatpush1.msra.mxu0 0.0
    %1120 = vmatprep.subr.mxu0 0.0
    %1121 = vmatpush1.msra.mxu0 0.0
    %1122 = vmatprep.subr.mxu0 0.0
    %1123 = vmatpush1.msra.mxu0 0.0
    %1124 = vmatprep.subr.mxu0 0.0
    %1125 = vmatpush1.msra.mxu0 0.0
    %1126 = vmatprep.subr.mxu0 0.0
    %1127 = vmatpush1.msra.mxu0 0.0
    %1128 = vmatprep.subr.mxu0 0.0
    %1129 = vmatpush1.msra.mxu0 0.0
    %1130 = vmatprep.subr.mxu0 0.0
    %1131 = vmatpush1.msra.mxu0 0.0
    %1132 = vmatprep.subr.mxu0 0.0
    %1133 = vmatpush1.msra.mxu0 0.0
    %1134 = vmatprep.subr.mxu0 0.0
    %1135 = vmatpush1.msra.mxu0 0.0
    %1136 = vmatprep.subr.mxu0 0.0
    %1137 = vmatpush1.msra.mxu0 0.0
    %1138 = vmatprep.subr.mxu0 0.0
    %1139 = vmatpush1.msra.mxu0 0.0
    %1140 = vmatprep.subr.mxu0 0.0
    %1141 = vmatpush1.msra.mxu0 0.0
    %1142 = vmatprep.subr.mxu0 0.0
    %1143 = vmatpush1.msra.mxu0 0.0
    %1144 = vmatprep.subr.mxu0 0.0
    %1145 = vmatpush1.msra.mxu0 0.0
    %1146 = vmatprep.subr.mxu0 0.0
    %1147 = vmatpush1.msra.mxu0 0.0
    %1148 = vmatprep.subr.mxu0 0.0
    %1149 = vmatpush1.msra.mxu0 0.0
    %1150 = vmatprep.subr.mxu0 0.0
    %1151 = vmatpush1.msra.mxu0 0.0
    %1152 = vmatprep.subr.mxu0 0.0
    %1153 = vmatpush1.msra.mxu0 0.0
    %1154 = vmatprep.subr.mxu0 0.0
    %1155 = vmatpush1.msra.mxu0 0.0
    %1156 = vmatprep.subr.mxu0 0.0
    %1157 = vmatpush1.msra.mxu0 0.0
    %1158 = vmatprep.mubr.f32.mxu0 0.0
    %v1159 = vand.u32 %v1082, 4294901760
    %v1160 = vsub.f32 %v1082, %v1159
    %v1161 = vand.u32 %v1160, 4294901760
    %v1162 = vsub.f32 %v1160, %v1161
    %v1163 = vand.u32 %v1162, 4294901760
    %1164 = vmatmul.mubr.f32.gmra.mrb[0].mxu0 %v1163
    %v1165 = vpop.f32.mrb[0].mxu0
    %v1166 = vadd.f32 %v1079, %v1165
    %v1167 = vpop.f32.mrb[0].mxu0
    %1168 = vdwg.mxu0
    %1169 = vmatprep.subr.mxu0 0.0
    %v1170 = vand.u32 %v1067, 4294901760
    %v1171 = vsub.f32 %v1067, %v1170
    %v1172 = vand.u32 %v1171, 4294901760
    %v1173 = vsub.f32 %v1171, %v1172
    %v1174 = vand.u32 %v1173, 4294901760
    %1175 = vmatpush1.msra.mxu0 %v1174
    %1176 = vmatprep.subr.mxu0 0.0
    %v1177 = vand.u32 %v1068, 4294901760
    %v1178 = vsub.f32 %v1068, %v1177
    %v1179 = vand.u32 %v1178, 4294901760
    %v1180 = vsub.f32 %v1178, %v1179
    %v1181 = vand.u32 %v1180, 4294901760
    %1182 = vmatpush1.msra.mxu0 %v1181
    %1183 = vmatprep.subr.mxu0 0.0
    %v1184 = vand.u32 %v1069, 4294901760
    %v1185 = vsub.f32 %v1069, %v1184
    %v1186 = vand.u32 %v1185, 4294901760
    %v1187 = vsub.f32 %v1185, %v1186
    %v1188 = vand.u32 %v1187, 4294901760
    %1189 = vmatpush1.msra.mxu0 %v1188
    %1190 = vmatprep.subr.mxu0 0.0
    %v1191 = vand.u32 %v1070, 4294901760
    %v1192 = vsub.f32 %v1070, %v1191
    %v1193 = vand.u32 %v1192, 4294901760
    %v1194 = vsub.f32 %v1192, %v1193
    %v1195 = vand.u32 %v1194, 4294901760
    %1196 = vmatpush1.msra.mxu0 %v1195
    %1197 = vmatprep.subr.mxu0 0.0
    %v1198 = vand.u32 %v1071, 4294901760
    %v1199 = vsub.f32 %v1071, %v1198
    %v1200 = vand.u32 %v1199, 4294901760
    %v1201 = vsub.f32 %v1199, %v1200
    %v1202 = vand.u32 %v1201, 4294901760
    %1203 = vmatpush1.msra.mxu0 %v1202
    %1204 = vmatprep.subr.mxu0 0.0
    %v1205 = vand.u32 %v1072, 4294901760
    %v1206 = vsub.f32 %v1072, %v1205
    %v1207 = vand.u32 %v1206, 4294901760
    %v1208 = vsub.f32 %v1206, %v1207
    %v1209 = vand.u32 %v1208, 4294901760
    %1210 = vmatpush1.msra.mxu0 %v1209
    %1211 = vmatprep.subr.mxu0 0.0
    %v1212 = vand.u32 %v1085, 4294901760
    %v1213 = vsub.f32 %v1085, %v1212
    %v1214 = vand.u32 %v1213, 4294901760
    %v1215 = vsub.f32 %v1213, %v1214
    %v1216 = vand.u32 %v1215, 4294901760
    %1217 = vmatpush1.msra.mxu0 %v1216
    %1218 = vmatprep.subr.mxu0 0.0
    %1219 = vmatpush1.msra.mxu0 0.0
    %1220 = vmatprep.subr.mxu0 0.0
    %1221 = vmatpush1.msra.mxu0 0.0
    %1222 = vmatprep.subr.mxu0 0.0
    %1223 = vmatpush1.msra.mxu0 0.0
    %1224 = vmatprep.subr.mxu0 0.0
    %1225 = vmatpush1.msra.mxu0 0.0
    %1226 = vmatprep.subr.mxu0 0.0
    %1227 = vmatpush1.msra.mxu0 0.0
    %1228 = vmatprep.subr.mxu0 0.0
    %1229 = vmatpush1.msra.mxu0 0.0
    %1230 = vmatprep.subr.mxu0 0.0
    %1231 = vmatpush1.msra.mxu0 0.0
    %1232 = vmatprep.subr.mxu0 0.0
    %1233 = vmatpush1.msra.mxu0 0.0
    %1234 = vmatprep.subr.mxu0 0.0
    %1235 = vmatpush1.msra.mxu0 0.0
    %1236 = vmatprep.subr.mxu0 0.0
    %1237 = vmatpush1.msra.mxu0 0.0
    %1238 = vmatprep.subr.mxu0 0.0
    %1239 = vmatpush1.msra.mxu0 0.0
    %1240 = vmatprep.subr.mxu0 0.0
    %1241 = vmatpush1.msra.mxu0 0.0
    %1242 = vmatprep.subr.mxu0 0.0
    %1243 = vmatpush1.msra.mxu0 0.0
    %1244 = vmatprep.subr.mxu0 0.0
    %1245 = vmatpush1.msra.mxu0 0.0
    %1246 = vmatprep.subr.mxu0 0.0
    %1247 = vmatpush1.msra.mxu0 0.0
    %1248 = vmatprep.subr.mxu0 0.0
    %1249 = vmatpush1.msra.mxu0 0.0
    %1250 = vmatprep.subr.mxu0 0.0
    %1251 = vmatpush1.msra.mxu0 0.0
    %1252 = vmatprep.subr.mxu0 0.0
    %1253 = vmatpush1.msra.mxu0 0.0
    %1254 = vmatprep.subr.mxu0 0.0
    %1255 = vmatpush1.msra.mxu0 0.0
    %1256 = vmatprep.subr.mxu0 0.0
    %1257 = vmatpush1.msra.mxu0 0.0
    %1258 = vmatprep.subr.mxu0 0.0
    %1259 = vmatpush1.msra.mxu0 0.0
    %1260 = vmatprep.subr.mxu0 0.0
    %1261 = vmatpush1.msra.mxu0 0.0
    %1262 = vmatprep.subr.mxu0 0.0
    %1263 = vmatpush1.msra.mxu0 0.0
    %1264 = vmatprep.subr.mxu0 0.0
    %1265 = vmatpush1.msra.mxu0 0.0
    %1266 = vmatprep.subr.mxu0 0.0
    %1267 = vmatpush1.msra.mxu0 0.0
    %1268 = vmatprep.mubr.f32.mxu0 0.0
    %v1269 = vand.u32 %v1082, 4294901760
    %1270 = vmatmul.mubr.f32.gmra.mrb[0].mxu0 %v1269
    %v1271 = vpop.f32.mrb[0].mxu0
    %v1272 = vadd.f32 %v1166, %v1271
    %v1273 = vpop.f32.mrb[0].mxu0
    %1274 = vdwg.mxu0
    %1275 = vmatprep.subr.mxu0 0.0
    %v1276 = vand.u32 %v1067, 4294901760
    %v1277 = vsub.f32 %v1067, %v1276
    %1278 = vmatpush1.msra.mxu0 %v1277
    %1279 = vmatprep.subr.mxu0 0.0
    %v1280 = vand.u32 %v1068, 4294901760
    %v1281 = vsub.f32 %v1068, %v1280
    %1282 = vmatpush1.msra.mxu0 %v1281
    %1283 = vmatprep.subr.mxu0 0.0
    %v1284 = vand.u32 %v1069, 4294901760
    %v1285 = vsub.f32 %v1069, %v1284
    %1286 = vmatpush1.msra.mxu0 %v1285
    %1287 = vmatprep.subr.mxu0 0.0
    %v1288 = vand.u32 %v1070, 4294901760
    %v1289 = vsub.f32 %v1070, %v1288
    %1290 = vmatpush1.msra.mxu0 %v1289
    %1291 = vmatprep.subr.mxu0 0.0
    %v1292 = vand.u32 %v1071, 4294901760
    %v1293 = vsub.f32 %v1071, %v1292
    %1294 = vmatpush1.msra.mxu0 %v1293
    %1295 = vmatprep.subr.mxu0 0.0
    %v1296 = vand.u32 %v1072, 4294901760
    %v1297 = vsub.f32 %v1072, %v1296
    %1298 = vmatpush1.msra.mxu0 %v1297
    %1299 = vmatprep.subr.mxu0 0.0
    %v1300 = vand.u32 %v1085, 4294901760
    %v1301 = vsub.f32 %v1085, %v1300
    %1302 = vmatpush1.msra.mxu0 %v1301
    %1303 = vmatprep.subr.mxu0 0.0
    %1304 = vmatpush1.msra.mxu0 0.0
    %1305 = vmatprep.subr.mxu0 0.0
    %1306 = vmatpush1.msra.mxu0 0.0
    %1307 = vmatprep.subr.mxu0 0.0
    %1308 = vmatpush1.msra.mxu0 0.0
    %1309 = vmatprep.subr.mxu0 0.0
    %1310 = vmatpush1.msra.mxu0 0.0
    %1311 = vmatprep.subr.mxu0 0.0
    %1312 = vmatpush1.msra.mxu0 0.0
    %1313 = vmatprep.subr.mxu0 0.0
    %1314 = vmatpush1.msra.mxu0 0.0
    %1315 = vmatprep.subr.mxu0 0.0
    %1316 = vmatpush1.msra.mxu0 0.0
    %1317 = vmatprep.subr.mxu0 0.0
    %1318 = vmatpush1.msra.mxu0 0.0
    %1319 = vmatprep.subr.mxu0 0.0
    %1320 = vmatpush1.msra.mxu0 0.0
    %1321 = vmatprep.subr.mxu0 0.0
    %1322 = vmatpush1.msra.mxu0 0.0
    %1323 = vmatprep.subr.mxu0 0.0
    %1324 = vmatpush1.msra.mxu0 0.0
    %1325 = vmatprep.subr.mxu0 0.0
    %1326 = vmatpush1.msra.mxu0 0.0
    %1327 = vmatprep.subr.mxu0 0.0
    %1328 = vmatpush1.msra.mxu0 0.0
    %1329 = vmatprep.subr.mxu0 0.0
    %1330 = vmatpush1.msra.mxu0 0.0
    %1331 = vmatprep.subr.mxu0 0.0
    %1332 = vmatpush1.msra.mxu0 0.0
    %1333 = vmatprep.subr.mxu0 0.0
    %1334 = vmatpush1.msra.mxu0 0.0
    %1335 = vmatprep.subr.mxu0 0.0
    %1336 = vmatpush1.msra.mxu0 0.0
    %1337 = vmatprep.subr.mxu0 0.0
    %1338 = vmatpush1.msra.mxu0 0.0
    %1339 = vmatprep.subr.mxu0 0.0
    %1340 = vmatpush1.msra.mxu0 0.0
    %1341 = vmatprep.subr.mxu0 0.0
    %1342 = vmatpush1.msra.mxu0 0.0
    %1343 = vmatprep.subr.mxu0 0.0
    %1344 = vmatpush1.msra.mxu0 0.0
    %1345 = vmatprep.subr.mxu0 0.0
    %1346 = vmatpush1.msra.mxu0 0.0
    %1347 = vmatprep.subr.mxu0 0.0
    %1348 = vmatpush1.msra.mxu0 0.0
    %1349 = vmatprep.subr.mxu0 0.0
    %1350 = vmatpush1.msra.mxu0 0.0
    %1351 = vmatprep.subr.mxu0 0.0
    %1352 = vmatpush1.msra.mxu0 0.0
    %1353 = vmatprep.mubr.f32.mxu0 0.0
    %v1354 = vand.u32 %v1082, 4294901760
    %v1355 = vsub.f32 %v1082, %v1354
    %1356 = vmatmul.mubr.f32.gmra.mrb[0].mxu0 %v1355
    %v1357 = vpop.f32.mrb[0].mxu0
    %v1358 = vadd.f32 %v1272, %v1357
    %v1359 = vpop.f32.mrb[0].mxu0
    %1360 = vdwg.mxu0
    %1361 = vmatprep.subr.mxu0 0.0
    %v1362 = vand.u32 %v1067, 4294901760
    %1363 = vmatpush1.msra.mxu0 %v1362
    %1364 = vmatprep.subr.mxu0 0.0
    %v1365 = vand.u32 %v1068, 4294901760
    %1366 = vmatpush1.msra.mxu0 %v1365
    %1367 = vmatprep.subr.mxu0 0.0
    %v1368 = vand.u32 %v1069, 4294901760
    %1369 = vmatpush1.msra.mxu0 %v1368
    %1370 = vmatprep.subr.mxu0 0.0
    %v1371 = vand.u32 %v1070, 4294901760
    %1372 = vmatpush1.msra.mxu0 %v1371
    %1373 = vmatprep.subr.mxu0 0.0
    %v1374 = vand.u32 %v1071, 4294901760
    %1375 = vmatpush1.msra.mxu0 %v1374
    %1376 = vmatprep.subr.mxu0 0.0
    %v1377 = vand.u32 %v1072, 4294901760
    %1378 = vmatpush1.msra.mxu0 %v1377
    %1379 = vmatprep.subr.mxu0 0.0
    %v1380 = vand.u32 %v1085, 4294901760
    %1381 = vmatpush1.msra.mxu0 %v1380
    %1382 = vmatprep.subr.mxu0 0.0
    %1383 = vmatpush1.msra.mxu0 0.0
    %1384 = vmatprep.subr.mxu0 0.0
    %1385 = vmatpush1.msra.mxu0 0.0
    %1386 = vmatprep.subr.mxu0 0.0
    %1387 = vmatpush1.msra.mxu0 0.0
    %1388 = vmatprep.subr.mxu0 0.0
    %1389 = vmatpush1.msra.mxu0 0.0
    %1390 = vmatprep.subr.mxu0 0.0
    %1391 = vmatpush1.msra.mxu0 0.0
    %1392 = vmatprep.subr.mxu0 0.0
    %1393 = vmatpush1.msra.mxu0 0.0
    %1394 = vmatprep.subr.mxu0 0.0
    %1395 = vmatpush1.msra.mxu0 0.0
    %1396 = vmatprep.subr.mxu0 0.0
    %1397 = vmatpush1.msra.mxu0 0.0
    %1398 = vmatprep.subr.mxu0 0.0
    %1399 = vmatpush1.msra.mxu0 0.0
    %1400 = vmatprep.subr.mxu0 0.0
    %1401 = vmatpush1.msra.mxu0 0.0
    %1402 = vmatprep.subr.mxu0 0.0
    %1403 = vmatpush1.msra.mxu0 0.0
    %1404 = vmatprep.subr.mxu0 0.0
    %1405 = vmatpush1.msra.mxu0 0.0
    %1406 = vmatprep.subr.mxu0 0.0
    %1407 = vmatpush1.msra.mxu0 0.0
    %1408 = vmatprep.subr.mxu0 0.0
    %1409 = vmatpush1.msra.mxu0 0.0
    %1410 = vmatprep.subr.mxu0 0.0
    %1411 = vmatpush1.msra.mxu0 0.0
    %1412 = vmatprep.subr.mxu0 0.0
    %1413 = vmatpush1.msra.mxu0 0.0
    %1414 = vmatprep.subr.mxu0 0.0
    %1415 = vmatpush1.msra.mxu0 0.0
    %1416 = vmatprep.subr.mxu0 0.0
    %1417 = vmatpush1.msra.mxu0 0.0
    %1418 = vmatprep.subr.mxu0 0.0
    %1419 = vmatpush1.msra.mxu0 0.0
    %1420 = vmatprep.subr.mxu0 0.0
    %1421 = vmatpush1.msra.mxu0 0.0
    %1422 = vmatprep.subr.mxu0 0.0
    %1423 = vmatpush1.msra.mxu0 0.0
    %1424 = vmatprep.subr.mxu0 0.0
    %1425 = vmatpush1.msra.mxu0 0.0
    %1426 = vmatprep.subr.mxu0 0.0
    %1427 = vmatpush1.msra.mxu0 0.0
    %1428 = vmatprep.subr.mxu0 0.0
    %1429 = vmatpush1.msra.mxu0 0.0
    %1430 = vmatprep.subr.mxu0 0.0
    %1431 = vmatpush1.msra.mxu0 0.0
    %1432 = vmatprep.mubr.f32.mxu0 0.0
    %v1433 = vand.u32 %v1082, 4294901760
    %v1434 = vsub.f32 %v1082, %v1433
    %v1435 = vand.u32 %v1434, 4294901760
    %1436 = vmatmul.mubr.f32.gmra.mrb[0].mxu0 %v1435
    %v1437 = vpop.f32.mrb[0].mxu0
    %v1438 = vadd.f32 %v1358, %v1437
    %v1439 = vpop.f32.mrb[0].mxu0
    %1440 = vdwg.mxu0
    %1441 = vmatprep.subr.mxu0 0.0
    %v1442 = vand.u32 %v1067, 4294901760
    %v1443 = vsub.f32 %v1067, %v1442
    %v1444 = vand.u32 %v1443, 4294901760
    %1445 = vmatpush1.msra.mxu0 %v1444
    %1446 = vmatprep.subr.mxu0 0.0
    %v1447 = vand.u32 %v1068, 4294901760
    %v1448 = vsub.f32 %v1068, %v1447
    %v1449 = vand.u32 %v1448, 4294901760
    %1450 = vmatpush1.msra.mxu0 %v1449
    %1451 = vmatprep.subr.mxu0 0.0
    %v1452 = vand.u32 %v1069, 4294901760
    %v1453 = vsub.f32 %v1069, %v1452
    %v1454 = vand.u32 %v1453, 4294901760
    %1455 = vmatpush1.msra.mxu0 %v1454
    %1456 = vmatprep.subr.mxu0 0.0
    %v1457 = vand.u32 %v1070, 4294901760
    %v1458 = vsub.f32 %v1070, %v1457
    %v1459 = vand.u32 %v1458, 4294901760
    %1460 = vmatpush1.msra.mxu0 %v1459
    %1461 = vmatprep.subr.mxu0 0.0
    %v1462 = vand.u32 %v1071, 4294901760
    %v1463 = vsub.f32 %v1071, %v1462
    %v1464 = vand.u32 %v1463, 4294901760
    %1465 = vmatpush1.msra.mxu0 %v1464
    %1466 = vmatprep.subr.mxu0 0.0
    %v1467 = vand.u32 %v1072, 4294901760
    %v1468 = vsub.f32 %v1072, %v1467
    %v1469 = vand.u32 %v1468, 4294901760
    %1470 = vmatpush1.msra.mxu0 %v1469
    %1471 = vmatprep.subr.mxu0 0.0
    %v1472 = vand.u32 %v1085, 4294901760
    %v1473 = vsub.f32 %v1085, %v1472
    %v1474 = vand.u32 %v1473, 4294901760
    %1475 = vmatpush1.msra.mxu0 %v1474
    %1476 = vmatprep.subr.mxu0 0.0
    %1477 = vmatpush1.msra.mxu0 0.0
    %1478 = vmatprep.subr.mxu0 0.0
    %1479 = vmatpush1.msra.mxu0 0.0
    %1480 = vmatprep.subr.mxu0 0.0
    %1481 = vmatpush1.msra.mxu0 0.0
    %1482 = vmatprep.subr.mxu0 0.0
    %1483 = vmatpush1.msra.mxu0 0.0
    %1484 = vmatprep.subr.mxu0 0.0
    %1485 = vmatpush1.msra.mxu0 0.0
    %1486 = vmatprep.subr.mxu0 0.0
    %1487 = vmatpush1.msra.mxu0 0.0
    %1488 = vmatprep.subr.mxu0 0.0
    %1489 = vmatpush1.msra.mxu0 0.0
    %1490 = vmatprep.subr.mxu0 0.0
    %1491 = vmatpush1.msra.mxu0 0.0
    %1492 = vmatprep.subr.mxu0 0.0
    %1493 = vmatpush1.msra.mxu0 0.0
    %1494 = vmatprep.subr.mxu0 0.0
    %1495 = vmatpush1.msra.mxu0 0.0
    %1496 = vmatprep.subr.mxu0 0.0
    %1497 = vmatpush1.msra.mxu0 0.0
    %1498 = vmatprep.subr.mxu0 0.0
    %1499 = vmatpush1.msra.mxu0 0.0
    %1500 = vmatprep.subr.mxu0 0.0
    %1501 = vmatpush1.msra.mxu0 0.0
    %1502 = vmatprep.subr.mxu0 0.0
    %1503 = vmatpush1.msra.mxu0 0.0
    %1504 = vmatprep.subr.mxu0 0.0
    %1505 = vmatpush1.msra.mxu0 0.0
    %1506 = vmatprep.subr.mxu0 0.0
    %1507 = vmatpush1.msra.mxu0 0.0
    %1508 = vmatprep.subr.mxu0 0.0
    %1509 = vmatpush1.msra.mxu0 0.0
    %1510 = vmatprep.subr.mxu0 0.0
    %1511 = vmatpush1.msra.mxu0 0.0
    %1512 = vmatprep.subr.mxu0 0.0
    %1513 = vmatpush1.msra.mxu0 0.0
    %1514 = vmatprep.subr.mxu0 0.0
    %1515 = vmatpush1.msra.mxu0 0.0
    %1516 = vmatprep.subr.mxu0 0.0
    %1517 = vmatpush1.msra.mxu0 0.0
    %1518 = vmatprep.subr.mxu0 0.0
    %1519 = vmatpush1.msra.mxu0 0.0
    %1520 = vmatprep.subr.mxu0 0.0
    %1521 = vmatpush1.msra.mxu0 0.0
    %1522 = vmatprep.subr.mxu0 0.0
    %1523 = vmatpush1.msra.mxu0 0.0
    %1524 = vmatprep.subr.mxu0 0.0
    %1525 = vmatpush1.msra.mxu0 0.0
    %1526 = vmatprep.mubr.f32.mxu0 0.0
    %v1527 = vand.u32 %v1082, 4294901760
    %1528 = vmatmul.mubr.f32.gmra.mrb[0].mxu0 %v1527
    %v1529 = vpop.f32.mrb[0].mxu0
    %v1530 = vadd.f32 %v1438, %v1529
    %v1531 = vpop.f32.mrb[0].mxu0
    %1532 = vdwg.mxu0
    %1533 = vmatprep.subr.mxu0 0.0
    %v1534 = vand.u32 %v1067, 4294901760
    %1535 = vmatpush1.msra.mxu0 %v1534
    %1536 = vmatprep.subr.mxu0 0.0
    %v1537 = vand.u32 %v1068, 4294901760
    %1538 = vmatpush1.msra.mxu0 %v1537
    %1539 = vmatprep.subr.mxu0 0.0
    %v1540 = vand.u32 %v1069, 4294901760
    %1541 = vmatpush1.msra.mxu0 %v1540
    %1542 = vmatprep.subr.mxu0 0.0
    %v1543 = vand.u32 %v1070, 4294901760
    %1544 = vmatpush1.msra.mxu0 %v1543
    %1545 = vmatprep.subr.mxu0 0.0
    %v1546 = vand.u32 %v1071, 4294901760
    %1547 = vmatpush1.msra.mxu0 %v1546
    %1548 = vmatprep.subr.mxu0 0.0
    %v1549 = vand.u32 %v1072, 4294901760
    %1550 = vmatpush1.msra.mxu0 %v1549
    %1551 = vmatprep.subr.mxu0 0.0
    %v1552 = vand.u32 %v1085, 4294901760
    %1553 = vmatpush1.msra.mxu0 %v1552
    %1554 = vmatprep.subr.mxu0 0.0
    %1555 = vmatpush1.msra.mxu0 0.0
    %1556 = vmatprep.subr.mxu0 0.0
    %1557 = vmatpush1.msra.mxu0 0.0
    %1558 = vmatprep.subr.mxu0 0.0
    %1559 = vmatpush1.msra.mxu0 0.0
    %1560 = vmatprep.subr.mxu0 0.0
    %1561 = vmatpush1.msra.mxu0 0.0
    %1562 = vmatprep.subr.mxu0 0.0
    %1563 = vmatpush1.msra.mxu0 0.0
    %1564 = vmatprep.subr.mxu0 0.0
    %1565 = vmatpush1.msra.mxu0 0.0
    %1566 = vmatprep.subr.mxu0 0.0
    %1567 = vmatpush1.msra.mxu0 0.0
    %1568 = vmatprep.subr.mxu0 0.0
    %1569 = vmatpush1.msra.mxu0 0.0
    %1570 = vmatprep.subr.mxu0 0.0
    %1571 = vmatpush1.msra.mxu0 0.0
    %1572 = vmatprep.subr.mxu0 0.0
    %1573 = vmatpush1.msra.mxu0 0.0
    %1574 = vmatprep.subr.mxu0 0.0
    %1575 = vmatpush1.msra.mxu0 0.0
    %1576 = vmatprep.subr.mxu0 0.0
    %1577 = vmatpush1.msra.mxu0 0.0
    %1578 = vmatprep.subr.mxu0 0.0
    %1579 = vmatpush1.msra.mxu0 0.0
    %1580 = vmatprep.subr.mxu0 0.0
    %1581 = vmatpush1.msra.mxu0 0.0
    %1582 = vmatprep.subr.mxu0 0.0
    %1583 = vmatpush1.msra.mxu0 0.0
    %1584 = vmatprep.subr.mxu0 0.0
    %1585 = vmatpush1.msra.mxu0 0.0
    %1586 = vmatprep.subr.mxu0 0.0
    %1587 = vmatpush1.msra.mxu0 0.0
    %1588 = vmatprep.subr.mxu0 0.0
    %1589 = vmatpush1.msra.mxu0 0.0
    %1590 = vmatprep.subr.mxu0 0.0
    %1591 = vmatpush1.msra.mxu0 0.0
    %1592 = vmatprep.subr.mxu0 0.0
    %1593 = vmatpush1.msra.mxu0 0.0
    %1594 = vmatprep.subr.mxu0 0.0
    %1595 = vmatpush1.msra.mxu0 0.0
    %1596 = vmatprep.subr.mxu0 0.0
    %1597 = vmatpush1.msra.mxu0 0.0
    %1598 = vmatprep.subr.mxu0 0.0
    %1599 = vmatpush1.msra.mxu0 0.0
    %1600 = vmatprep.subr.mxu0 0.0
    %1601 = vmatpush1.msra.mxu0 0.0
    %1602 = vmatprep.subr.mxu0 0.0
    %1603 = vmatpush1.msra.mxu0 0.0
    %1604 = vmatprep.mubr.f32.mxu0 0.0
    %v1605 = vand.u32 %v1082, 4294901760
    %1606 = vmatmul.mubr.f32.gmra.mrb[0].mxu0 %v1605
    %v1607 = vpop.f32.mrb[0].mxu0
    %v1608 = vadd.f32 %v1530, %v1607
    %v1609 = vpop.f32.mrb[0].mxu0
    %1610 = vdwg.mxu0
    %vm1611 = vcmask 15360
    %1612 = vst.msk [vmem:[%s7] sm:$0xff] %vm1611, %v1608
    // Predicated region
    $region34: #{tpu_custom_call.1} parent=1 // pred_check
      _
    $region35: #{tpu_custom_call.1} parent=1 // pred_check_branch
      %1614 = sbr.rel (0) target = $region37
    $region36: #{tpu_custom_call.1} parent=1 // pred_region
      _
    $region37: #{tpu_custom_call.1} parent=1 // pred_fallthru
      _
    // Predicated region
    $region38: #{tpu_custom_call.1} parent=1 // pred_check
      _
    $region39: #{tpu_custom_call.1} parent=1 // pred_check_branch
      %1616 = sbr.rel (0) target = $region41
    $region40: #{tpu_custom_call.1} parent=1 // pred_region
      _
    $region41: #{tpu_custom_call.1} parent=1 // pred_fallthru
      _
    %1617 = vsyncpa [#allocation3], 1

</llo_original>
